<compile_context>
chip_gen: v6e
topology: v6e:2x2x1
jax: 0.10.0
libtpu: 0.0.40
codegen_flags: <defaults>
</compile_context>

<pallas_src>
import jax
import jax.numpy as jnp
import numpy as np
from jax.experimental import pallas as pl
from jax.experimental.pallas import tpu as pltpu

ITERS = 3           # iter_
ALPHA = 0.5         # alpha
SMOOTH = 1.0        # smooth for clDice
DICE_SMOOTH_NR = 1e-5
DICE_SMOOTH_DR = 1e-5
_BIG = 1e30         # stand-in for the +/-inf padding of torch max_pool2d


# ---------------------------------------------------------------------------
# In-kernel soft-morphology helpers over a stack of independent images laid
# out along the sublane axis: x has shape (k * img_h, W).
# ---------------------------------------------------------------------------
def _make_morphology(shape, img_h):
    """Return (erode, dilate) closures with the boundary masks hoisted.

    The masks mark the top/bottom row of every stacked image (which includes
    the seam between images) and the left/right columns, so the hot loop only
    does roll + select + min/max — no per-call iota/compare.
    """
    rows, cols = shape
    row_in_img = jax.lax.broadcasted_iota(jnp.int32, shape, 0) % img_h
    col_idx = jax.lax.broadcasted_iota(jnp.int32, shape, 1)
    top = row_in_img == 0
    bot = row_in_img == img_h - 1
    lef = col_idx == 0
    rig = col_idx == cols - 1

    def _nbr_v(x):
        up = pltpu.roll(x, shift=1, axis=0)          # y[i] = x[i-1]
        dn = pltpu.roll(x, shift=rows - 1, axis=0)   # y[i] = x[i+1]
        return up, dn

    def _nbr_h(x):
        lf = pltpu.roll(x, shift=1, axis=1)          # y[j] = x[j-1]
        rt = pltpu.roll(x, shift=cols - 1, axis=1)   # y[j] = x[j+1]
        return lf, rt

    def erode(x):
        # torch: min(-maxpool(-x,(3,1),pad(1,0)), -maxpool(-x,(1,3),pad(0,1)))
        up, dn = _nbr_v(x)
        lf, rt = _nbr_h(x)
        v = jnp.minimum(jnp.minimum(x, jnp.where(top, _BIG, up)),
                        jnp.where(bot, _BIG, dn))
        h = jnp.minimum(jnp.minimum(x, jnp.where(lef, _BIG, lf)),
                        jnp.where(rig, _BIG, rt))
        return jnp.minimum(v, h)

    def dilate(x):
        # torch: maxpool(x, (3,3), pad (1,1))  (separable max)
        up, dn = _nbr_v(x)
        m = jnp.maximum(jnp.maximum(x, jnp.where(top, -_BIG, up)),
                        jnp.where(bot, -_BIG, dn))
        lf, rt = _nbr_h(m)
        return jnp.maximum(jnp.maximum(m, jnp.where(lef, -_BIG, lf)),
                           jnp.where(rig, -_BIG, rt))

    return erode, dilate


def _soft_skel(x, iters, erode, dilate):
    # soft_open(y) = dilate(erode(y)).  The erode inside open(img) is exactly
    # the erode the next iteration recomputes as `img = soft_erode(img)`, so
    # carry the eroded image instead of recomputing it (4 erodes vs 7).
    er = erode(x)
    skel = jax.nn.relu(x - dilate(er))        # x - soft_open(x)
    img = er
    for _ in range(iters):
        er = erode(img)
        delta = jax.nn.relu(img - dilate(er))  # img - soft_open(img)
        skel = skel + jax.nn.relu(delta - skel * delta)
        img = er
    return skel


# ---------------------------------------------------------------------------
# Pallas kernel: per-batch partial sums for dice + clDice.
# ---------------------------------------------------------------------------
def _cldice_stats_kernel(pred_ref, true_ref, out_ref):
    # pred_ref: (1, 2, H, W) logits ; true_ref: (1, 1, H, W) labels in {0, 1}
    l0 = pred_ref[0, 0]
    l1 = pred_ref[0, 1]
    lab = true_ref[0, 0]
    H, W = l0.shape

    # 2-class softmax — only the foreground probability is needed; background
    # statistics are recovered algebraically in the wrapper.
    m = jnp.maximum(l0, l1)
    e0 = jnp.exp(l0 - m)
    e1 = jnp.exp(l1 - m)
    den = e0 + e1
    inv = pl.reciprocal(den, approx=True)   # EUP
    inv = inv * (2.0 - den * inv)           # one Newton step -> f32 accuracy
    p1 = e1 * inv

    # one_hot(y_true, 2)[:, 1]  (labels assumed binary, as torch one_hot needs)
    t1 = (lab == 1.0).astype(jnp.float32)

    # Stack pred/true foreground maps along sublanes and skeletonise both in a
    # single pass; the seam between the two images is masked like a border.
    pt = jnp.concatenate([p1, t1], axis=0)            # (2H, W) = [p1 ; t1]
    erode, dilate = _make_morphology((2 * H, W), H)
    skel = _soft_skel(pt, ITERS, erode, dilate)       # [skel(p1) ; skel(t1)]

    pt_sw = jnp.concatenate([t1, p1], axis=0)         # (2H, W) = [t1 ; p1]

    # Lane (W) reductions on the otherwise idle MXU; the tiny sublane sums of
    # the per-row columns are finished in the wrapper.
    ones_w = jnp.ones((W, 1), jnp.float32)

    def row_sums(x):
        return jnp.dot(x, ones_w, preferred_element_type=jnp.float32)  # (2H, 1)

    cols = jnp.concatenate(
        [
            row_sums(pt),             # rows [:H]: p1          rows [H:]: t1
            row_sums(skel),           #            skel(p1)               skel(t1)
            row_sums(skel * pt_sw),   #            skel(p1)*t1            skel(t1)*p1
            row_sums(pt * pt_sw),     #            p1*t1                  (duplicate)
        ],
        axis=1,
    )                                  # (2H, 4)
    out_ref[0] = cols


def soft_dice_cldice_loss(y_pred, y_true, alpha=ALPHA, smooth=SMOOTH):
    """y_pred: (B, 2, H, W) logits; y_true: (B, 1, H, W) labels in {0, 1}."""
    B, C, H, W = y_pred.shape
    assert C == 2, "num_classes is fixed to 2 by the module"

    # VMEM budget: double-buffered input blocks + skeleton temporaries.
    block_bytes = (C + 1) * H * W * 4
    work_bytes = 24 * (2 * H * W) * 4
    vmem_limit = int(min(64 * 2**20,
                         max(32 * 2**20, 2 * block_bytes + work_bytes + (1 << 20))))
    # TODO(synk): for very large H*W on v7x (64 MiB VMEM), add an H-tile grid
    # axis with a 2*(ITERS+1)-row recomputed halo (also feeds the 2nd core);
    # for W < 128 production shapes, pack 128//W images along lanes.

    cols = pl.pallas_call(
        _cldice_stats_kernel,
        out_shape=jax.ShapeDtypeStruct((B, 2 * H, 4), jnp.float32),
        grid_spec=pltpu.PrefetchScalarGridSpec(
            num_scalar_prefetch=0,
            grid=(B,),
            in_specs=[
                pl.BlockSpec((1, C, H, W), lambda b: (b, 0, 0, 0)),
                pl.BlockSpec((1, 1, H, W), lambda b: (b, 0, 0, 0)),
            ],
            out_specs=pl.BlockSpec((1, 2 * H, 4), lambda b: (b, 0, 0)),
        ),
        compiler_params=pltpu.CompilerParams(
            dimension_semantics=("parallel",),
            vmem_limit_bytes=vmem_limit,
        ),
    )(y_pred.astype(jnp.float32), y_true.astype(jnp.float32))

    top = jnp.sum(cols[:, :H, :], axis=1)   # (B, 4): p1 / skel_p / skel_p*t1 / p1*t1
    bot = jnp.sum(cols[:, H:, :], axis=1)   # (B, 4): t1 / skel_t / skel_t*p1 / dup

    s_p1, s_skp, s_spt, s_i1 = (top[:, k] for k in range(4))
    s_t1, s_skt, s_stp, _ = (bot[:, k] for k in range(4))

    # MONAI DiceLoss (include_background=True, per-(b, c) then mean).  Channel-0
    # stats follow from p0 = 1 - p1 and t0 = 1 - t1 (binary labels).
    hw = float(H * W)
    i1 = s_i1
    d1 = s_p1 + s_t1
    i0 = hw - s_p1 - s_t1 + s_i1
    d0 = 2.0 * hw - s_p1 - s_t1
    f0 = 1.0 - (2.0 * i0 + DICE_SMOOTH_NR) / (d0 + DICE_SMOOTH_DR)
    f1 = 1.0 - (2.0 * i1 + DICE_SMOOTH_NR) / (d1 + DICE_SMOOTH_DR)
    dice = jnp.mean(jnp.concatenate([f0, f1]))

    # clDice
    tprec = (jnp.sum(s_spt) + smooth) / (jnp.sum(s_skp) + smooth)
    tsens = (jnp.sum(s_stp) + smooth) / (jnp.sum(s_skt) + smooth)
    cl_dice = 1.0 - 2.0 * (tprec * tsens) / (tprec + tsens)

    return (1.0 - alpha) * dice + alpha * cl_dice


# ---------------------------------------------------------------------------
# Pure-JAX reference (mirrors the PyTorch semantics) for a sanity check.
# ---------------------------------------------------------------------------
def _ref_maxpool(x, kh, kw):
    return jax.lax.reduce_window(
        x, -jnp.inf, jax.lax.max,
        (1, 1, kh, kw), (1, 1, 1, 1),
        [(0, 0), (0, 0), (kh // 2, kh // 2), (kw // 2, kw // 2)],
    )


def _ref_erode(x):
    return jnp.minimum(-_ref_maxpool(-x, 3, 1), -_ref_maxpool(-x, 1, 3))


def _ref_open(x):
    return _ref_maxpool(_ref_erode(x), 3, 3)


def _ref_soft_skel(x, iters):
    skel = jax.nn.relu(x - _ref_open(x))
    for _ in range(iters):
        x = _ref_erode(x)
        delta = jax.nn.relu(x - _ref_open(x))
        skel = skel + jax.nn.relu(delta - skel * delta)
    return skel


def _reference_loss(y_pred, y_true):
    t1 = (y_true[:, 0] == 1.0).astype(jnp.float32)
    t0 = (y_true[:, 0] == 0.0).astype(jnp.float32)
    yt = jnp.stack([t0, t1], axis=1)
    yp = jax.nn.softmax(y_pred, axis=1)
    inter = jnp.sum(yp * yt, axis=(2, 3))
    denom = jnp.sum(yt, axis=(2, 3)) + jnp.sum(yp, axis=(2, 3))
    dice = jnp.mean(1.0 - (2.0 * inter + DICE_SMOOTH_NR) / (denom + DICE_SMOOTH_DR))
    sp = _ref_soft_skel(yp, ITERS)
    st = _ref_soft_skel(yt, ITERS)
    tprec = (jnp.sum((sp * yt)[:, 1:]) + SMOOTH) / (jnp.sum(sp[:, 1:]) + SMOOTH)
    tsens = (jnp.sum((st * yp)[:, 1:]) + SMOOTH) / (jnp.sum(st[:, 1:]) + SMOOTH)
    cl = 1.0 - 2.0 * (tprec * tsens) / (tprec + tsens)
    return (1.0 - ALPHA) * dice + ALPHA * cl


if __name__ == "__main__":
    def _check(B, H, W, key):
        k1, k2 = jax.random.split(key)
        y_pred = jax.random.normal(k1, (B, 2, H, W), jnp.float32)          # logits
        y_true = jax.random.bernoulli(k2, 0.3, (B, 1, H, W)).astype(jnp.float32)
        loss = jax.block_until_ready(soft_dice_cldice_loss(y_pred, y_true))
        ref = jax.block_until_ready(_reference_loss(y_pred, y_true))
        assert np.allclose(np.array(loss), np.array(ref), rtol=1e-4, atol=1e-4), (
            (B, H, W), loss, ref)

    key = jax.random.PRNGKey(0)
    k1, k2 = jax.random.split(key)
    _check(2, 16, 16, k1)      # small shape consistent with the module
    _check(1, 24, 128, k2)     # lane-dense (W = 128) sanity check
    print("KERNEL_OK")
</pallas_src>

<mosaic_0001>
module attributes {stable_mosaic.version = 11 : i64} {
  func.func @_cldice_stats_kernel(%arg0: i32, %arg1: memref<1x2x16x16xf32, #tpu.memory_space<vmem>>, %arg2: memref<1x1x16x16xf32, #tpu.memory_space<vmem>>, %arg3: memref<1x32x4xf32, #tpu.memory_space<vmem>>) attributes {dimension_semantics = [#tpu.dimension_semantics<parallel>], iteration_bounds = array<i64: 2>, scalar_prefetch = 0 : i64, scratch_operands = 0 : i64, tpu.core_type = #tpu.core_type<tc>, window_params = [{transform_indices = @transform_0, window_bounds = array<i64: 1, 2, 16, 16>}, {transform_indices = @transform_1, window_bounds = array<i64: 1, 1, 16, 16>}, {transform_indices = @transform_2, window_bounds = array<i64: 1, 32, 4>}]} {
    %c0 = arith.constant 0 : index
    %c0_0 = arith.constant 0 : index
    %c0_1 = arith.constant 0 : index
    %c0_2 = arith.constant 0 : index
    %0 = vector.load %arg1[%c0, %c0_0, %c0_1, %c0_2] : memref<1x2x16x16xf32, #tpu.memory_space<vmem>>, vector<1x1x16x16xf32>
    %1 = vector.shape_cast %0 : vector<1x1x16x16xf32> to vector<16x16xf32>
    %c0_3 = arith.constant 0 : index
    %c1 = arith.constant 1 : index
    %c0_4 = arith.constant 0 : index
    %c0_5 = arith.constant 0 : index
    %2 = vector.load %arg1[%c0_3, %c1, %c0_4, %c0_5] : memref<1x2x16x16xf32, #tpu.memory_space<vmem>>, vector<1x1x16x16xf32>
    %3 = vector.shape_cast %2 : vector<1x1x16x16xf32> to vector<16x16xf32>
    %c0_6 = arith.constant 0 : index
    %c0_7 = arith.constant 0 : index
    %c0_8 = arith.constant 0 : index
    %c0_9 = arith.constant 0 : index
    %4 = vector.load %arg2[%c0_6, %c0_7, %c0_8, %c0_9] : memref<1x1x16x16xf32, #tpu.memory_space<vmem>>, vector<1x1x16x16xf32>
    %5 = vector.shape_cast %4 : vector<1x1x16x16xf32> to vector<16x16xf32>
    %6 = arith.maximumf %1, %3 : vector<16x16xf32>
    %7 = arith.subf %1, %6 : vector<16x16xf32>
    %8 = math.exp %7 : vector<16x16xf32>
    %9 = arith.subf %3, %6 : vector<16x16xf32>
    %10 = math.exp %9 : vector<16x16xf32>
    %11 = arith.addf %8, %10 : vector<16x16xf32>
    %12 = tpu.reciprocal %11 {approx = true} : vector<16x16xf32> -> vector<16x16xf32>
    %13 = arith.mulf %11, %12 : vector<16x16xf32>
    %cst = arith.constant 2.000000e+00 : f32
    %14 = vector.broadcast %cst : f32 to vector<16x16xf32>
    %15 = arith.subf %14, %13 : vector<16x16xf32>
    %16 = arith.mulf %12, %15 : vector<16x16xf32>
    %17 = arith.mulf %10, %16 : vector<16x16xf32>
    %cst_10 = arith.constant 1.000000e+00 : f32
    %18 = vector.broadcast %cst_10 : f32 to vector<16x16xf32>
    %19 = arith.cmpf oeq, %5, %18 : vector<16x16xf32>
    %20 = arith.extui %19 : vector<16x16xi1> to vector<16x16xi32>
    %21 = arith.sitofp %20 : vector<16x16xi32> to vector<16x16xf32>
    %22 = tpu.concatenate %17, %21 in 0 : vector<16x16xf32>, vector<16x16xf32> -> vector<32x16xf32>
    %23 = tpu.iota {dimensions = array<i32: 0>} : vector<32x16xi32>
    %c16_i32 = arith.constant 16 : i32
    %c0_i32 = arith.constant 0 : i32
    %24 = arith.cmpi eq, %c16_i32, %c0_i32 : i32
    %c1_i32 = arith.constant 1 : i32
    %25 = arith.select %24, %c1_i32, %c16_i32 : i32
    %26 = vector.broadcast %25 : i32 to vector<32x16xi32>
    %27 = arith.remsi %23, %26 : vector<32x16xi32>
    %c0_i32_11 = arith.constant 0 : i32
    %28 = vector.broadcast %c0_i32_11 : i32 to vector<32x16xi32>
    %29 = arith.cmpi ne, %27, %28 : vector<32x16xi32>
    %c0_i32_12 = arith.constant 0 : i32
    %30 = vector.broadcast %c0_i32_12 : i32 to vector<32x16xi32>
    %31 = arith.cmpi slt, %27, %30 : vector<32x16xi32>
    %c0_i32_13 = arith.constant 0 : i32
    %32 = arith.cmpi slt, %25, %c0_i32_13 : i32
    %33 = vector.broadcast %32 : i1 to vector<32x16xi1>
    %34 = vector.broadcast %33 : vector<32x16xi1> to vector<32x16xi1>
    %35 = arith.xori %31, %34 : vector<32x16xi1>
    %36 = arith.andi %35, %29 : vector<32x16xi1>
    %37 = vector.broadcast %25 : i32 to vector<32x16xi32>
    %38 = arith.addi %27, %37 : vector<32x16xi32>
    %39 = arith.select %36, %38, %27 : vector<32x16xi1>, vector<32x16xi32>
    %40 = tpu.iota {dimensions = array<i32: 1>} : vector<32x16xi32>
    %c0_i32_14 = arith.constant 0 : i32
    %41 = vector.broadcast %c0_i32_14 : i32 to vector<32x16xi32>
    %42 = arith.cmpi eq, %39, %41 : vector<32x16xi32>
    %c15_i32 = arith.constant 15 : i32
    %43 = vector.broadcast %c15_i32 : i32 to vector<32x16xi32>
    %44 = arith.cmpi eq, %39, %43 : vector<32x16xi32>
    %c0_i32_15 = arith.constant 0 : i32
    %45 = vector.broadcast %c0_i32_15 : i32 to vector<32x16xi32>
    %46 = arith.cmpi eq, %40, %45 : vector<32x16xi32>
    %c15_i32_16 = arith.constant 15 : i32
    %47 = vector.broadcast %c15_i32_16 : i32 to vector<32x16xi32>
    %48 = arith.cmpi eq, %40, %47 : vector<32x16xi32>
    %c1_i32_17 = arith.constant 1 : i32
    %49 = tpu.dynamic_rotate %22 by %c1_i32_17 dim 0 : vector<32x16xf32>, i32 -> vector<32x16xf32>
    %c31_i32 = arith.constant 31 : i32
    %50 = tpu.dynamic_rotate %22 by %c31_i32 dim 0 : vector<32x16xf32>, i32 -> vector<32x16xf32>
    %c1_i32_18 = arith.constant 1 : i32
    %51 = tpu.dynamic_rotate %22 by %c1_i32_18 dim 1 : vector<32x16xf32>, i32 -> vector<32x16xf32>
    %c15_i32_19 = arith.constant 15 : i32
    %52 = tpu.dynamic_rotate %22 by %c15_i32_19 dim 1 : vector<32x16xf32>, i32 -> vector<32x16xf32>
    %cst_20 = arith.constant 1.000000e+30 : f32
    %53 = vector.broadcast %cst_20 : f32 to vector<32x16xf32>
    %54 = arith.select %42, %53, %49 : vector<32x16xi1>, vector<32x16xf32>
    %55 = arith.minimumf %22, %54 : vector<32x16xf32>
    %cst_21 = arith.constant 1.000000e+30 : f32
    %56 = vector.broadcast %cst_21 : f32 to vector<32x16xf32>
    %57 = arith.select %44, %56, %50 : vector<32x16xi1>, vector<32x16xf32>
    %58 = arith.minimumf %55, %57 : vector<32x16xf32>
    %cst_22 = arith.constant 1.000000e+30 : f32
    %59 = vector.broadcast %cst_22 : f32 to vector<32x16xf32>
    %60 = arith.select %46, %59, %51 : vector<32x16xi1>, vector<32x16xf32>
    %61 = arith.minimumf %22, %60 : vector<32x16xf32>
    %cst_23 = arith.constant 1.000000e+30 : f32
    %62 = vector.broadcast %cst_23 : f32 to vector<32x16xf32>
    %63 = arith.select %48, %62, %52 : vector<32x16xi1>, vector<32x16xf32>
    %64 = arith.minimumf %61, %63 : vector<32x16xf32>
    %65 = arith.minimumf %58, %64 : vector<32x16xf32>
    %c1_i32_24 = arith.constant 1 : i32
    %66 = tpu.dynamic_rotate %65 by %c1_i32_24 dim 0 : vector<32x16xf32>, i32 -> vector<32x16xf32>
    %c31_i32_25 = arith.constant 31 : i32
    %67 = tpu.dynamic_rotate %65 by %c31_i32_25 dim 0 : vector<32x16xf32>, i32 -> vector<32x16xf32>
    %cst_26 = arith.constant -1.000000e+30 : f32
    %68 = vector.broadcast %cst_26 : f32 to vector<32x16xf32>
    %69 = arith.select %42, %68, %66 : vector<32x16xi1>, vector<32x16xf32>
    %70 = arith.maximumf %65, %69 : vector<32x16xf32>
    %cst_27 = arith.constant -1.000000e+30 : f32
    %71 = vector.broadcast %cst_27 : f32 to vector<32x16xf32>
    %72 = arith.select %44, %71, %67 : vector<32x16xi1>, vector<32x16xf32>
    %73 = arith.maximumf %70, %72 : vector<32x16xf32>
    %c1_i32_28 = arith.constant 1 : i32
    %74 = tpu.dynamic_rotate %73 by %c1_i32_28 dim 1 : vector<32x16xf32>, i32 -> vector<32x16xf32>
    %c15_i32_29 = arith.constant 15 : i32
    %75 = tpu.dynamic_rotate %73 by %c15_i32_29 dim 1 : vector<32x16xf32>, i32 -> vector<32x16xf32>
    %cst_30 = arith.constant -1.000000e+30 : f32
    %76 = vector.broadcast %cst_30 : f32 to vector<32x16xf32>
    %77 = arith.select %46, %76, %74 : vector<32x16xi1>, vector<32x16xf32>
    %78 = arith.maximumf %73, %77 : vector<32x16xf32>
    %cst_31 = arith.constant -1.000000e+30 : f32
    %79 = vector.broadcast %cst_31 : f32 to vector<32x16xf32>
    %80 = arith.select %48, %79, %75 : vector<32x16xi1>, vector<32x16xf32>
    %81 = arith.maximumf %78, %80 : vector<32x16xf32>
    %82 = arith.subf %22, %81 : vector<32x16xf32>
    %cst_32 = arith.constant 0.000000e+00 : f32
    %83 = vector.broadcast %cst_32 : f32 to vector<32x16xf32>
    %84 = arith.maximumf %82, %83 : vector<32x16xf32>
    %c1_i32_33 = arith.constant 1 : i32
    %85 = tpu.dynamic_rotate %65 by %c1_i32_33 dim 0 : vector<32x16xf32>, i32 -> vector<32x16xf32>
    %c31_i32_34 = arith.constant 31 : i32
    %86 = tpu.dynamic_rotate %65 by %c31_i32_34 dim 0 : vector<32x16xf32>, i32 -> vector<32x16xf32>
    %c1_i32_35 = arith.constant 1 : i32
    %87 = tpu.dynamic_rotate %65 by %c1_i32_35 dim 1 : vector<32x16xf32>, i32 -> vector<32x16xf32>
    %c15_i32_36 = arith.constant 15 : i32
    %88 = tpu.dynamic_rotate %65 by %c15_i32_36 dim 1 : vector<32x16xf32>, i32 -> vector<32x16xf32>
    %cst_37 = arith.constant 1.000000e+30 : f32
    %89 = vector.broadcast %cst_37 : f32 to vector<32x16xf32>
    %90 = arith.select %42, %89, %85 : vector<32x16xi1>, vector<32x16xf32>
    %91 = arith.minimumf %65, %90 : vector<32x16xf32>
    %cst_38 = arith.constant 1.000000e+30 : f32
    %92 = vector.broadcast %cst_38 : f32 to vector<32x16xf32>
    %93 = arith.select %44, %92, %86 : vector<32x16xi1>, vector<32x16xf32>
    %94 = arith.minimumf %91, %93 : vector<32x16xf32>
    %cst_39 = arith.constant 1.000000e+30 : f32
    %95 = vector.broadcast %cst_39 : f32 to vector<32x16xf32>
    %96 = arith.select %46, %95, %87 : vector<32x16xi1>, vector<32x16xf32>
    %97 = arith.minimumf %65, %96 : vector<32x16xf32>
    %cst_40 = arith.constant 1.000000e+30 : f32
    %98 = vector.broadcast %cst_40 : f32 to vector<32x16xf32>
    %99 = arith.select %48, %98, %88 : vector<32x16xi1>, vector<32x16xf32>
    %100 = arith.minimumf %97, %99 : vector<32x16xf32>
    %101 = arith.minimumf %94, %100 : vector<32x16xf32>
    %c1_i32_41 = arith.constant 1 : i32
    %102 = tpu.dynamic_rotate %101 by %c1_i32_41 dim 0 : vector<32x16xf32>, i32 -> vector<32x16xf32>
    %c31_i32_42 = arith.constant 31 : i32
    %103 = tpu.dynamic_rotate %101 by %c31_i32_42 dim 0 : vector<32x16xf32>, i32 -> vector<32x16xf32>
    %cst_43 = arith.constant -1.000000e+30 : f32
    %104 = vector.broadcast %cst_43 : f32 to vector<32x16xf32>
    %105 = arith.select %42, %104, %102 : vector<32x16xi1>, vector<32x16xf32>
    %106 = arith.maximumf %101, %105 : vector<32x16xf32>
    %cst_44 = arith.constant -1.000000e+30 : f32
    %107 = vector.broadcast %cst_44 : f32 to vector<32x16xf32>
    %108 = arith.select %44, %107, %103 : vector<32x16xi1>, vector<32x16xf32>
    %109 = arith.maximumf %106, %108 : vector<32x16xf32>
    %c1_i32_45 = arith.constant 1 : i32
    %110 = tpu.dynamic_rotate %109 by %c1_i32_45 dim 1 : vector<32x16xf32>, i32 -> vector<32x16xf32>
    %c15_i32_46 = arith.constant 15 : i32
    %111 = tpu.dynamic_rotate %109 by %c15_i32_46 dim 1 : vector<32x16xf32>, i32 -> vector<32x16xf32>
    %cst_47 = arith.constant -1.000000e+30 : f32
    %112 = vector.broadcast %cst_47 : f32 to vector<32x16xf32>
    %113 = arith.select %46, %112, %110 : vector<32x16xi1>, vector<32x16xf32>
    %114 = arith.maximumf %109, %113 : vector<32x16xf32>
    %cst_48 = arith.constant -1.000000e+30 : f32
    %115 = vector.broadcast %cst_48 : f32 to vector<32x16xf32>
    %116 = arith.select %48, %115, %111 : vector<32x16xi1>, vector<32x16xf32>
    %117 = arith.maximumf %114, %116 : vector<32x16xf32>
    %118 = arith.subf %65, %117 : vector<32x16xf32>
    %cst_49 = arith.constant 0.000000e+00 : f32
    %119 = vector.broadcast %cst_49 : f32 to vector<32x16xf32>
    %120 = arith.maximumf %118, %119 : vector<32x16xf32>
    %121 = arith.mulf %84, %120 : vector<32x16xf32>
    %122 = arith.subf %120, %121 : vector<32x16xf32>
    %cst_50 = arith.constant 0.000000e+00 : f32
    %123 = vector.broadcast %cst_50 : f32 to vector<32x16xf32>
    %124 = arith.maximumf %122, %123 : vector<32x16xf32>
    %125 = arith.addf %84, %124 : vector<32x16xf32>
    %c1_i32_51 = arith.constant 1 : i32
    %126 = tpu.dynamic_rotate %101 by %c1_i32_51 dim 0 : vector<32x16xf32>, i32 -> vector<32x16xf32>
    %c31_i32_52 = arith.constant 31 : i32
    %127 = tpu.dynamic_rotate %101 by %c31_i32_52 dim 0 : vector<32x16xf32>, i32 -> vector<32x16xf32>
    %c1_i32_53 = arith.constant 1 : i32
    %128 = tpu.dynamic_rotate %101 by %c1_i32_53 dim 1 : vector<32x16xf32>, i32 -> vector<32x16xf32>
    %c15_i32_54 = arith.constant 15 : i32
    %129 = tpu.dynamic_rotate %101 by %c15_i32_54 dim 1 : vector<32x16xf32>, i32 -> vector<32x16xf32>
    %cst_55 = arith.constant 1.000000e+30 : f32
    %130 = vector.broadcast %cst_55 : f32 to vector<32x16xf32>
    %131 = arith.select %42, %130, %126 : vector<32x16xi1>, vector<32x16xf32>
    %132 = arith.minimumf %101, %131 : vector<32x16xf32>
    %cst_56 = arith.constant 1.000000e+30 : f32
    %133 = vector.broadcast %cst_56 : f32 to vector<32x16xf32>
    %134 = arith.select %44, %133, %127 : vector<32x16xi1>, vector<32x16xf32>
    %135 = arith.minimumf %132, %134 : vector<32x16xf32>
    %cst_57 = arith.constant 1.000000e+30 : f32
    %136 = vector.broadcast %cst_57 : f32 to vector<32x16xf32>
    %137 = arith.select %46, %136, %128 : vector<32x16xi1>, vector<32x16xf32>
    %138 = arith.minimumf %101, %137 : vector<32x16xf32>
    %cst_58 = arith.constant 1.000000e+30 : f32
    %139 = vector.broadcast %cst_58 : f32 to vector<32x16xf32>
    %140 = arith.select %48, %139, %129 : vector<32x16xi1>, vector<32x16xf32>
    %141 = arith.minimumf %138, %140 : vector<32x16xf32>
    %142 = arith.minimumf %135, %141 : vector<32x16xf32>
    %c1_i32_59 = arith.constant 1 : i32
    %143 = tpu.dynamic_rotate %142 by %c1_i32_59 dim 0 : vector<32x16xf32>, i32 -> vector<32x16xf32>
    %c31_i32_60 = arith.constant 31 : i32
    %144 = tpu.dynamic_rotate %142 by %c31_i32_60 dim 0 : vector<32x16xf32>, i32 -> vector<32x16xf32>
    %cst_61 = arith.constant -1.000000e+30 : f32
    %145 = vector.broadcast %cst_61 : f32 to vector<32x16xf32>
    %146 = arith.select %42, %145, %143 : vector<32x16xi1>, vector<32x16xf32>
    %147 = arith.maximumf %142, %146 : vector<32x16xf32>
    %cst_62 = arith.constant -1.000000e+30 : f32
    %148 = vector.broadcast %cst_62 : f32 to vector<32x16xf32>
    %149 = arith.select %44, %148, %144 : vector<32x16xi1>, vector<32x16xf32>
    %150 = arith.maximumf %147, %149 : vector<32x16xf32>
    %c1_i32_63 = arith.constant 1 : i32
    %151 = tpu.dynamic_rotate %150 by %c1_i32_63 dim 1 : vector<32x16xf32>, i32 -> vector<32x16xf32>
    %c15_i32_64 = arith.constant 15 : i32
    %152 = tpu.dynamic_rotate %150 by %c15_i32_64 dim 1 : vector<32x16xf32>, i32 -> vector<32x16xf32>
    %cst_65 = arith.constant -1.000000e+30 : f32
    %153 = vector.broadcast %cst_65 : f32 to vector<32x16xf32>
    %154 = arith.select %46, %153, %151 : vector<32x16xi1>, vector<32x16xf32>
    %155 = arith.maximumf %150, %154 : vector<32x16xf32>
    %cst_66 = arith.constant -1.000000e+30 : f32
    %156 = vector.broadcast %cst_66 : f32 to vector<32x16xf32>
    %157 = arith.select %48, %156, %152 : vector<32x16xi1>, vector<32x16xf32>
    %158 = arith.maximumf %155, %157 : vector<32x16xf32>
    %159 = arith.subf %101, %158 : vector<32x16xf32>
    %cst_67 = arith.constant 0.000000e+00 : f32
    %160 = vector.broadcast %cst_67 : f32 to vector<32x16xf32>
    %161 = arith.maximumf %159, %160 : vector<32x16xf32>
    %162 = arith.mulf %125, %161 : vector<32x16xf32>
    %163 = arith.subf %161, %162 : vector<32x16xf32>
    %cst_68 = arith.constant 0.000000e+00 : f32
    %164 = vector.broadcast %cst_68 : f32 to vector<32x16xf32>
    %165 = arith.maximumf %163, %164 : vector<32x16xf32>
    %166 = arith.addf %125, %165 : vector<32x16xf32>
    %c1_i32_69 = arith.constant 1 : i32
    %167 = tpu.dynamic_rotate %142 by %c1_i32_69 dim 0 : vector<32x16xf32>, i32 -> vector<32x16xf32>
    %c31_i32_70 = arith.constant 31 : i32
    %168 = tpu.dynamic_rotate %142 by %c31_i32_70 dim 0 : vector<32x16xf32>, i32 -> vector<32x16xf32>
    %c1_i32_71 = arith.constant 1 : i32
    %169 = tpu.dynamic_rotate %142 by %c1_i32_71 dim 1 : vector<32x16xf32>, i32 -> vector<32x16xf32>
    %c15_i32_72 = arith.constant 15 : i32
    %170 = tpu.dynamic_rotate %142 by %c15_i32_72 dim 1 : vector<32x16xf32>, i32 -> vector<32x16xf32>
    %cst_73 = arith.constant 1.000000e+30 : f32
    %171 = vector.broadcast %cst_73 : f32 to vector<32x16xf32>
    %172 = arith.select %42, %171, %167 : vector<32x16xi1>, vector<32x16xf32>
    %173 = arith.minimumf %142, %172 : vector<32x16xf32>
    %cst_74 = arith.constant 1.000000e+30 : f32
    %174 = vector.broadcast %cst_74 : f32 to vector<32x16xf32>
    %175 = arith.select %44, %174, %168 : vector<32x16xi1>, vector<32x16xf32>
    %176 = arith.minimumf %173, %175 : vector<32x16xf32>
    %cst_75 = arith.constant 1.000000e+30 : f32
    %177 = vector.broadcast %cst_75 : f32 to vector<32x16xf32>
    %178 = arith.select %46, %177, %169 : vector<32x16xi1>, vector<32x16xf32>
    %179 = arith.minimumf %142, %178 : vector<32x16xf32>
    %cst_76 = arith.constant 1.000000e+30 : f32
    %180 = vector.broadcast %cst_76 : f32 to vector<32x16xf32>
    %181 = arith.select %48, %180, %170 : vector<32x16xi1>, vector<32x16xf32>
    %182 = arith.minimumf %179, %181 : vector<32x16xf32>
    %183 = arith.minimumf %176, %182 : vector<32x16xf32>
    %c1_i32_77 = arith.constant 1 : i32
    %184 = tpu.dynamic_rotate %183 by %c1_i32_77 dim 0 : vector<32x16xf32>, i32 -> vector<32x16xf32>
    %c31_i32_78 = arith.constant 31 : i32
    %185 = tpu.dynamic_rotate %183 by %c31_i32_78 dim 0 : vector<32x16xf32>, i32 -> vector<32x16xf32>
    %cst_79 = arith.constant -1.000000e+30 : f32
    %186 = vector.broadcast %cst_79 : f32 to vector<32x16xf32>
    %187 = arith.select %42, %186, %184 : vector<32x16xi1>, vector<32x16xf32>
    %188 = arith.maximumf %183, %187 : vector<32x16xf32>
    %cst_80 = arith.constant -1.000000e+30 : f32
    %189 = vector.broadcast %cst_80 : f32 to vector<32x16xf32>
    %190 = arith.select %44, %189, %185 : vector<32x16xi1>, vector<32x16xf32>
    %191 = arith.maximumf %188, %190 : vector<32x16xf32>
    %c1_i32_81 = arith.constant 1 : i32
    %192 = tpu.dynamic_rotate %191 by %c1_i32_81 dim 1 : vector<32x16xf32>, i32 -> vector<32x16xf32>
    %c15_i32_82 = arith.constant 15 : i32
    %193 = tpu.dynamic_rotate %191 by %c15_i32_82 dim 1 : vector<32x16xf32>, i32 -> vector<32x16xf32>
    %cst_83 = arith.constant -1.000000e+30 : f32
    %194 = vector.broadcast %cst_83 : f32 to vector<32x16xf32>
    %195 = arith.select %46, %194, %192 : vector<32x16xi1>, vector<32x16xf32>
    %196 = arith.maximumf %191, %195 : vector<32x16xf32>
    %cst_84 = arith.constant -1.000000e+30 : f32
    %197 = vector.broadcast %cst_84 : f32 to vector<32x16xf32>
    %198 = arith.select %48, %197, %193 : vector<32x16xi1>, vector<32x16xf32>
    %199 = arith.maximumf %196, %198 : vector<32x16xf32>
    %200 = arith.subf %142, %199 : vector<32x16xf32>
    %cst_85 = arith.constant 0.000000e+00 : f32
    %201 = vector.broadcast %cst_85 : f32 to vector<32x16xf32>
    %202 = arith.maximumf %200, %201 : vector<32x16xf32>
    %203 = arith.mulf %166, %202 : vector<32x16xf32>
    %204 = arith.subf %202, %203 : vector<32x16xf32>
    %cst_86 = arith.constant 0.000000e+00 : f32
    %205 = vector.broadcast %cst_86 : f32 to vector<32x16xf32>
    %206 = arith.maximumf %204, %205 : vector<32x16xf32>
    %207 = arith.addf %166, %206 : vector<32x16xf32>
    %208 = tpu.concatenate %21, %17 in 0 : vector<16x16xf32>, vector<16x16xf32> -> vector<32x16xf32>
    %cst_87 = arith.constant 1.000000e+00 : f32
    %209 = vector.broadcast %cst_87 : f32 to vector<16x1xf32>
    %cst_88 = arith.constant dense<0.000000e+00> : vector<32x1xf32>
    %210 = tpu.matmul %22, %209, %cst_88 {dimension_numbers = #tpu.dot_dimension_numbers<[1], [0], [0], [1], [0, 0, 1, 1], [], []>} : vector<32x16xf32>, vector<16x1xf32>, vector<32x1xf32> -> vector<32x1xf32>
    %cst_89 = arith.constant dense<0.000000e+00> : vector<32x1xf32>
    %211 = tpu.matmul %207, %209, %cst_89 {dimension_numbers = #tpu.dot_dimension_numbers<[1], [0], [0], [1], [0, 0, 1, 1], [], []>} : vector<32x16xf32>, vector<16x1xf32>, vector<32x1xf32> -> vector<32x1xf32>
    %212 = arith.mulf %207, %208 : vector<32x16xf32>
    %cst_90 = arith.constant dense<0.000000e+00> : vector<32x1xf32>
    %213 = tpu.matmul %212, %209, %cst_90 {dimension_numbers = #tpu.dot_dimension_numbers<[1], [0], [0], [1], [0, 0, 1, 1], [], []>} : vector<32x16xf32>, vector<16x1xf32>, vector<32x1xf32> -> vector<32x1xf32>
    %214 = arith.mulf %22, %208 : vector<32x16xf32>
    %cst_91 = arith.constant dense<0.000000e+00> : vector<32x1xf32>
    %215 = tpu.matmul %214, %209, %cst_91 {dimension_numbers = #tpu.dot_dimension_numbers<[1], [0], [0], [1], [0, 0, 1, 1], [], []>} : vector<32x16xf32>, vector<16x1xf32>, vector<32x1xf32> -> vector<32x1xf32>
    %216 = tpu.concatenate %210, %211, %213, %215 in 1 : vector<32x1xf32>, vector<32x1xf32>, vector<32x1xf32>, vector<32x1xf32> -> vector<32x4xf32>
    %c0_92 = arith.constant 0 : index
    %c0_93 = arith.constant 0 : index
    %c0_94 = arith.constant 0 : index
    %217 = vector.load %arg3[%c0_92, %c0_93, %c0_94] : memref<1x32x4xf32, #tpu.memory_space<vmem>>, vector<1x32x4xf32>
    %218 = vector.shape_cast %217 : vector<1x32x4xf32> to vector<32x4xf32>
    %219 = vector.shape_cast %216 : vector<32x4xf32> to vector<1x32x4xf32>
    tpu.vector_store %arg3[%c0_92, %c0_93, %c0_94], %219 {strides = array<i32>} : memref<1x32x4xf32, #tpu.memory_space<vmem>>, vector<1x32x4xf32>,
    return
  }
  func.func @transform_0(%arg0: i32) -> (i32, i32, i32, i32) {
    %c0_i32 = arith.constant 0 : i32
    %c0_i32_0 = arith.constant 0 : i32
    %c0_i32_1 = arith.constant 0 : i32
    %c0_i32_2 = arith.constant 0 : i32
    return %arg0, %c0_i32, %c0_i32_0, %c0_i32_1 : i32, i32, i32, i32
  }
  func.func @transform_1(%arg0: i32) -> (i32, i32, i32, i32) {
    %c0_i32 = arith.constant 0 : i32
    %c0_i32_0 = arith.constant 0 : i32
    %c0_i32_1 = arith.constant 0 : i32
    %c0_i32_2 = arith.constant 0 : i32
    return %arg0, %c0_i32, %c0_i32_0, %c0_i32_1 : i32, i32, i32, i32
  }
  func.func @transform_2(%arg0: i32) -> (i32, i32, i32) {
    %c0_i32 = arith.constant 0 : i32
    %c0_i32_0 = arith.constant 0 : i32
    %c0_i32_1 = arith.constant 0 : i32
    return %arg0, %c0_i32, %c0_i32_0 : i32, i32, i32
  }
}

</mosaic_0001>

<llo_original>
// kernel: tpu_custom_call.1
$region0: #{tpu_custom_call.1}
  #allocation0 [shape = 'u32[]', space=smem, size = 0x4, offset = 0x4, fixed_abs, tag = 'smem constant byte address 0x4 - core index']
  #allocation1 [shape = 'u32[144,128]{1,0:T(1,128)}', space=vmem, size = 0x12000, scoped, tag = 'internal scratch']
  %s0 = inlined_call_operand.hbm [shape: f32[2,2,16,16], index: 0, kind: input, shape index: {}]
  %s1 = inlined_call_operand.hbm [shape: f32[2,1,16,16], index: 1, kind: input, shape index: {}]
  %s2 = inlined_call_operand.vmem [shape: f32[2,32,4], index: 2, kind: output, shape index: {}]
  %s3 = sld [smem:[#allocation0]]
  $region49: #{tpu_custom_call.1} parent=0
    _
  %s5 = ssub.s32 1, %s3
  %s6 = scalar_select 0, %s5, %s3
  $region1: #{tpu_custom_call.1} parent=0
    #allocation2 [shape = 'u8[32768]{0}', space=vmem, size = 0x8000, scoped, tag = 'input window, operand 0']
    #allocation3 [shape = 's32[2]{0}', space=sflag, size = 0x8, scoped, tag = 'scoped memory for tpu_custom_call.1']
    #allocation4 [shape = 'u8[16384]{0}', space=vmem, size = 0x4000, scoped, tag = 'input window, operand 1']
    #allocation5 [shape = 's32[2]{0}', space=sflag, size = 0x8, scoped, tag = 'scoped memory for tpu_custom_call.1']
    %7 = vsyncpa [#allocation3], 0
    %s8 = scalar_lea.sflag [#allocation3], 1
    %9 = vsyncpa %s8, 0
    %10 = vsyncpa [#allocation5], 0
    %s11 = scalar_lea.sflag [#allocation5], 1
    %12 = vsyncpa %s11, 0
    loop: start=0, step=1, limit=4
    $region2: #{tpu_custom_call.1} parent=1 // loop_pre_header
      _
    $region3: #{tpu_custom_call.1} parent=1 // loop_header
      %s14 = sphi 0, %s18
      %p15 = scmp.ge.s32.totalorder %s14, 4
      %s24 = sphi 0, %s26
      %s27 = sphi 0, %s24
      %s28 = sphi 0, %s27
      %s44 = sphi 0, %s28
      %s50 = sphi 0, %s52
      %s53 = sphi 0, %s50
      %s54 = sphi 0, %s53
      %s70 = sphi 0, %s54
      %s76 = sphi 0, %s78
      %s79 = sphi 0, %s76
      %s80 = sphi 0, %s79
      %s96 = sphi 0, %s80
    $region4: #{tpu_custom_call.1} parent=1 // loop_header_branch
      %17 = sbr.rel (%p15) target = $region8
    $region5: #{tpu_custom_call.1} parent=1 // loop_body
      %s19 = ssub.s32 %s14, 1
      %s20 = ssub.s32 %s14, 2
      %s21 = sadd.s32 %s14, 1
      %s22 = ssub.s32 %s14, %s21
      %p23 = scmp.eq.s32.totalorder %s22, 0
      %s25 = sadd.s32 %s24, 1
      %s26 = scalar_select %p23, %s24, %s25
      %p29 = pneg %p23
      %p30 = scmp.eq.s32.totalorder %s14, 1
      %p31 = por %p29, %p30
      %p32 = scmp.ne.s32.totalorder %s24, %s27
      %p33 = scmp.eq.s32.totalorder %s14, 0
      %p34 = por %p32, %p33
      %p35 = scmp.ne.s32.totalorder %s24, %s27
      %p36 = scmp.eq.s32.totalorder %s19, 1
      %p37 = por %p35, %p36
      %p38 = scmp.ne.s32.totalorder %s27, %s28
      %p39 = scmp.eq.s32.totalorder %s19, 0
      %p40 = por %p38, %p39
      %p41 = scmp.ne.s32.totalorder %s27, %s28
      %p42 = scmp.eq.s32.totalorder %s20, 1
      %p43 = por %p41, %p42
      %p45 = scmp.ne.s32.totalorder %s28, %s44
      %p46 = scmp.eq.s32.totalorder %s20, 0
      %p47 = por %p45, %p46
      %s48 = ssub.s32 %s14, %s21
      %p49 = scmp.eq.s32.totalorder %s48, 0
      %s51 = sadd.s32 %s50, 1
      %s52 = scalar_select %p49, %s50, %s51
      %p55 = pneg %p49
      %p56 = scmp.eq.s32.totalorder %s14, 1
      %p57 = por %p55, %p56
      %p58 = scmp.ne.s32.totalorder %s50, %s53
      %p59 = scmp.eq.s32.totalorder %s14, 0
      %p60 = por %p58, %p59
      %p61 = scmp.ne.s32.totalorder %s50, %s53
      %p62 = scmp.eq.s32.totalorder %s19, 1
      %p63 = por %p61, %p62
      %p64 = scmp.ne.s32.totalorder %s53, %s54
      %p65 = scmp.eq.s32.totalorder %s19, 0
      %p66 = por %p64, %p65
      %p67 = scmp.ne.s32.totalorder %s53, %s54
      %p68 = scmp.eq.s32.totalorder %s20, 1
      %p69 = por %p67, %p68
      %p71 = scmp.ne.s32.totalorder %s54, %s70
      %p72 = scmp.eq.s32.totalorder %s20, 0
      %p73 = por %p71, %p72
      %s74 = ssub.s32 %s14, %s21
      %p75 = scmp.eq.s32.totalorder %s74, 0
      %s77 = sadd.s32 %s76, 1
      %s78 = scalar_select %p75, %s76, %s77
      %p81 = pneg %p75
      %p82 = scmp.eq.s32.totalorder %s14, 1
      %p83 = por %p81, %p82
      %p84 = scmp.ne.s32.totalorder %s76, %s79
      %p85 = scmp.eq.s32.totalorder %s14, 0
      %p86 = por %p84, %p85
      %p87 = scmp.ne.s32.totalorder %s76, %s79
      %p88 = scmp.eq.s32.totalorder %s19, 1
      %p89 = por %p87, %p88
      %p90 = scmp.ne.s32.totalorder %s79, %s80
      %p91 = scmp.eq.s32.totalorder %s19, 0
      %p92 = por %p90, %p91
      %p93 = scmp.ne.s32.totalorder %s79, %s80
      %p94 = scmp.eq.s32.totalorder %s20, 1
      %p95 = por %p93, %p94
      %p97 = scmp.ne.s32.totalorder %s80, %s96
      %p98 = scmp.eq.s32.totalorder %s20, 0
      %p99 = por %p97, %p98
      %p100 = scmp.le.s32.totalorder 1, %s14
      %p101 = scmp.lt.s32.totalorder %s14, 3
      %p102 = pnand %p100, %p101
      %p103 = pneg %p102
      // Predicated region
      $region9: #{tpu_custom_call.1} parent=5 // pred_check
        _
      $region10: #{tpu_custom_call.1} parent=5 // pred_check_branch
        %105 = sbr.rel (%p102) target = $region12
      $region11: #{tpu_custom_call.1} parent=5 // pred_region
        %s106 = ssub.s32 %s14, 1
      $region12: #{tpu_custom_call.1} parent=5 // pred_fallthru
        _
      %p107 = scmp.lt.s32.totalorder %s14, 2
      // Predicated region
      $region13: #{tpu_custom_call.1} parent=5 // pred_check
        %p108 = pneg %p107
      $region14: #{tpu_custom_call.1} parent=5 // pred_check_branch
        %110 = sbr.rel (%p108) target = $region16
      $region15: #{tpu_custom_call.1} parent=5 // pred_region
        // Predicated region
        $region17: #{tpu_custom_call.1} parent=15 // pred_check
          %p111 = pneg %p34
        $region18: #{tpu_custom_call.1} parent=15 // pred_check_branch
          %113 = sbr.rel (%p111) target = $region20
        $region19: #{tpu_custom_call.1} parent=15 // pred_region
          %s114 = sand.u32 %s24, 1
          %s115 = scalar_lea.sflag [#allocation3], %s114
          %s116 = sand.u32 %s24, 1
          %s117 = smul.addr %s116, 32
          %s118 = scalar_lea.vmem [#allocation2], %s117
          %s120 = ssub.s32 512, 512
          %121 = vsyncadd %s115, %s120
          %s122 = smul.addr %s14, 4
          %s123 = smul.addr %s122, 128
          %s124 = scalar_lea.hbm %s0, %s123
          %s125 = sshll.u32 %s118, 4
          %s126 = int_to_ptr.vmem [resolvable:$true] %s125
          %131 = dma.hbm_to_vmem [thread:$0]  %s124, 512, %s126, %s115, 128, 128, 8
        $region20: #{tpu_custom_call.1} parent=15 // pred_fallthru
          _
        // Predicated region
        $region21: #{tpu_custom_call.1} parent=15 // pred_check
          %p132 = pneg %p60
        $region22: #{tpu_custom_call.1} parent=15 // pred_check_branch
          %134 = sbr.rel (%p132) target = $region24
        $region23: #{tpu_custom_call.1} parent=15 // pred_region
          %s135 = sand.u32 %s50, 1
          %s136 = scalar_lea.sflag [#allocation5], %s135
          %s137 = sand.u32 %s50, 1
          %s138 = smul.addr %s137, 16
          %s139 = scalar_lea.vmem [#allocation4], %s138
          %s141 = ssub.s32 256, 256
          %142 = vsyncadd %s136, %s141
          %s143 = smul.addr %s14, 2
          %s144 = smul.addr %s143, 128
          %s145 = scalar_lea.hbm %s1, %s144
          %s146 = sshll.u32 %s139, 4
          %s147 = int_to_ptr.vmem [resolvable:$true] %s146
          %152 = dma.hbm_to_vmem [thread:$0]  %s145, 256, %s147, %s136, 128, 128, 8
        $region24: #{tpu_custom_call.1} parent=15 // pred_fallthru
          _
      $region16: #{tpu_custom_call.1} parent=5 // pred_fallthru
        _
      %p153 = scmp.le.s32.totalorder 1, %s14
      %p154 = scmp.lt.s32.totalorder %s14, 3
      %p155 = pnand %p153, %p154
      %p156 = pneg %p155
      // Predicated region
      $region25: #{tpu_custom_call.1} parent=5 // pred_check
        _
      $region26: #{tpu_custom_call.1} parent=5 // pred_check_branch
        %158 = sbr.rel (%p155) target = $region28
      $region27: #{tpu_custom_call.1} parent=5 // pred_region
        %s159 = ssub.s32 %s14, 1
        %s160 = sand.u32 %s27, 1
        %s161 = scalar_lea.sflag [#allocation3], %s160
        %s162 = sand.u32 %s27, 1
        %s163 = smul.addr %s162, 32
        %s164 = scalar_lea.vmem [#allocation2], %s163
        // Predicated region
        $region29: #{tpu_custom_call.1} parent=27 // pred_check
          %p165 = pneg %p40
        $region30: #{tpu_custom_call.1} parent=27 // pred_check_branch
          %167 = sbr.rel (%p165) target = $region32
        $region31: #{tpu_custom_call.1} parent=27 // pred_region
          %168 = dma.done %s161, 512
        $region32: #{tpu_custom_call.1} parent=27 // pred_fallthru
          _
        %s169 = sand.u32 %s53, 1
        %s170 = scalar_lea.sflag [#allocation5], %s169
        %s171 = sand.u32 %s53, 1
        %s172 = smul.addr %s171, 16
        %s173 = scalar_lea.vmem [#allocation4], %s172
        // Predicated region
        $region33: #{tpu_custom_call.1} parent=27 // pred_check
          %p174 = pneg %p66
        $region34: #{tpu_custom_call.1} parent=27 // pred_check_branch
          %176 = sbr.rel (%p174) target = $region36
        $region35: #{tpu_custom_call.1} parent=27 // pred_region
          %177 = dma.done %s170, 256
        $region36: #{tpu_custom_call.1} parent=27 // pred_fallthru
          _
        %s178 = sand.u32 %s27, 1
        %s179 = scalar_lea.sflag [#allocation3], %s178
        %s180 = sand.u32 %s27, 1
        %s181 = smul.addr %s180, 32
        %s182 = scalar_lea.vmem [#allocation2], %s181
        %p183 = pneg %p40
        %p184 = pneg %p37
        %s185 = sand.u32 %s53, 1
        %s186 = scalar_lea.sflag [#allocation5], %s185
        %s187 = sand.u32 %s53, 1
        %s188 = smul.addr %s187, 16
        %s189 = scalar_lea.vmem [#allocation4], %s188
        %p190 = pneg %p66
        %p191 = pneg %p63
        %p192 = pneg %p92
        %p193 = pneg %p89
        %p194 = scmp.lt.s32.totalorder %s19, 1
        %s195 = scalar_select %p194, %s19, 1
        %s196 = smul.addr %s195, 4
        %s197 = smul.addr %s196, 8
        %s198 = scalar_lea.vmem %s2, %s197
        %p199 = scmp.lt.s32.totalorder %s19, 1
        %s200 = scalar_select %p199, %s19, 1
        %s201 = smul.addr %s200, 4
        %s202 = smul.addr %s201, 8
        %s203 = scalar_lea.vmem %s2, %s202
        %v204 = vld [vmem:[%s164] sm:$0xff]
        %v205 = vld [vmem:[%s164 + $0x8] sm:$0xff]
        %s206 = scalar_lea.vmem %s164, 16 [#allocation2]
        %v207 = vld [vmem:[%s206] sm:$0xff]
        %v208 = vld [vmem:[%s206 + $0x8] sm:$0xff]
        %v209 = vld [vmem:[%s173] sm:$0xff]
        %v210 = vld [vmem:[%s173 + $0x8] sm:$0xff]
        %v211 = vmax.f32 %v204, %v207
        %v212 = vmax.f32 %v205, %v208
        %v213 = vsub.f32 %v204, %v211
        %v214 = vsub.f32 %v205, %v212
        %v215 = vmul.f32 %v213, 1.442695
        %v216 = vpow.pop %v215
        %v217 = vmul.f32 %v214, 1.442695
        %v218 = vpow.pop %v217
        %v219 = vsub.f32 %v207, %v211
        %v220 = vsub.f32 %v208, %v212
        %v221 = vmul.f32 %v219, 1.442695
        %v222 = vpow.pop %v221
        %v223 = vmul.f32 %v220, 1.442695
        %v224 = vpow.pop %v223
        %v225 = vadd.f32 %v216, %v222
        %v226 = vadd.f32 %v218, %v224
        %v227 = vrcp.pop %v225
        %v228 = vrcp.pop %v226
        %v229 = vmul.f32 %v225, %v227
        %v230 = vmul.f32 %v226, %v228
        %v231 = vsub.f32 2.0, %v229
        %v232 = vsub.f32 2.0, %v230
        %v233 = vmul.f32 %v227, %v231
        %v234 = vmul.f32 %v228, %v232
        %v235 = vmul.f32 %v222, %v233
        %v236 = vmul.f32 %v224, %v234
        %vm237 = vcmp.eq.f32.partialorder %v209, 1.0
        %vm238 = vcmp.eq.f32.partialorder %v210, 1.0
        %v239 = vsel %vm237, 1, 0
        %v240 = vsel %vm238, 1, 0
        %v241 = vcvt.s32.f32 %v239
        %v242 = vcvt.s32.f32 %v240
        %v243 = vlaneseq
        %v244 = vshrl.u32 %v243, 7
        %v245 = vadd.s32 %v244, 8
        %v246 = vadd.s32 %v244, 16
        %v247 = vadd.s32 %v244, 24
        %vm248 = vcmp.lt.s32.totalorder %v244, 0
        %v249 = vsub.s32 0, %v244
        %v250 = vsel %vm248, %v249, %v244
        %v251 = vshrl.u32 %v250, 4
        %v252 = vand.u32 %v250, 15
        %v253 = vsub.s32 0, %v252
        %v254 = vsel %vm248, %v253, %v252
        %vm255 = vcmp.lt.s32.totalorder %v245, 0
        %v256 = vsub.s32 0, %v245
        %v257 = vsel %vm255, %v256, %v245
        %v258 = vshrl.u32 %v257, 4
        %v259 = vand.u32 %v257, 15
        %v260 = vsub.s32 0, %v259
        %v261 = vsel %vm255, %v260, %v259
        %vm262 = vcmp.lt.s32.totalorder %v246, 0
        %v263 = vsub.s32 0, %v246
        %v264 = vsel %vm262, %v263, %v246
        %v265 = vshrl.u32 %v264, 4
        %v266 = vand.u32 %v264, 15
        %v267 = vsub.s32 0, %v266
        %v268 = vsel %vm262, %v267, %v266
        %vm269 = vcmp.lt.s32.totalorder %v247, 0
        %v270 = vsub.s32 0, %v247
        %v271 = vsel %vm269, %v270, %v247
        %v272 = vshrl.u32 %v271, 4
        %v273 = vand.u32 %v271, 15
        %v274 = vsub.s32 0, %v273
        %v275 = vsel %vm269, %v274, %v273
        %vm276 = vcmp.ne.s32.totalorder %v254, 0
        %vm277 = vcmp.ne.s32.totalorder %v261, 0
        %vm278 = vcmp.ne.s32.totalorder %v268, 0
        %vm279 = vcmp.ne.s32.totalorder %v275, 0
        %vm280 = vcmp.lt.s32.totalorder %v254, 0
        %vm281 = vcmp.lt.s32.totalorder %v261, 0
        %vm282 = vcmp.lt.s32.totalorder %v268, 0
        %vm283 = vcmp.lt.s32.totalorder %v275, 0
        %vm284 = vmand %vm280, %vm276
        %vm285 = vmand %vm281, %vm277
        %vm286 = vmand %vm282, %vm278
        %vm287 = vmand %vm283, %vm279
        %v288 = vadd.s32 %v254, 16
        %v289 = vadd.s32 %v261, 16
        %v290 = vadd.s32 %v268, 16
        %v291 = vadd.s32 %v275, 16
        %v292 = vsel %vm284, %v288, %v254
        %v293 = vsel %vm285, %v289, %v261
        %v294 = vsel %vm286, %v290, %v268
        %v295 = vsel %vm287, %v291, %v275
        %v296 = vlaneseq
        %v297 = vand.u32 %v296, 127
        %vm298 = vcmp.eq.s32.totalorder %v292, 0
        %vm299 = vcmp.eq.s32.totalorder %v293, 0
        %vm300 = vcmp.eq.s32.totalorder %v294, 0
        %vm301 = vcmp.eq.s32.totalorder %v295, 0
        %vm302 = vcmp.eq.s32.totalorder %v292, 15
        %vm303 = vcmp.eq.s32.totalorder %v293, 15
        %vm304 = vcmp.eq.s32.totalorder %v294, 15
        %vm305 = vcmp.eq.s32.totalorder %v295, 15
        %vm306 = vcmp.eq.s32.totalorder %v297, 0
        %vm307 = vcmp.eq.s32.totalorder %v297, 15
        %v308 = vrot.slane %v235, 7
        %v309 = vrot.slane %v236, 7
        %v310 = vrot.slane %v241, 7
        %v311 = vrot.slane %v242, 7
        %vm312 = vcmp.lt.s32.totalorder %v244, 1
        %v313 = vsel %vm312, %v310, %v311
        %v314 = vsel %vm312, %v309, %v310
        %v315 = vsel %vm312, %v308, %v309
        %v316 = vsel %vm312, %v311, %v308
        %v317 = vrot.slane %v235, 1
        %v318 = vrot.slane %v236, 1
        %v319 = vrot.slane %v241, 1
        %v320 = vrot.slane %v242, 1
        %vm321 = vcmp.lt.s32.totalorder %v244, 7
        %v322 = vsel %vm321, %v319, %v320
        %v323 = vsel %vm321, %v318, %v319
        %v324 = vsel %vm321, %v317, %v318
        %v325 = vsel %vm321, %v320, %v317
        %vm326 = vcmask 1047680
        %327 = vrot.lane.b32.xlu0 %v235, 16
        %v328 = vpop.permute.xlu0 %327
        %v329 = vsel %vm326, %v328, %v235
        %330 = vrot.lane.b32.xlu0 %v236, 16
        %v331 = vpop.permute.xlu0 %330
        %v332 = vsel %vm326, %v331, %v236
        %333 = vrot.lane.b32.xlu0 %v241, 16
        %v334 = vpop.permute.xlu0 %333
        %v335 = vsel %vm326, %v334, %v241
        %336 = vrot.lane.b32.xlu0 %v242, 16
        %v337 = vpop.permute.xlu0 %336
        %v338 = vsel %vm326, %v337, %v242
        %339 = vrot.lane.b32.xlu0 %v329, 16
        %v340 = vpop.permute.xlu0 %339
        %341 = vrot.lane.b32.xlu0 %v332, 16
        %v342 = vpop.permute.xlu0 %341
        %343 = vrot.lane.b32.xlu0 %v335, 16
        %v344 = vpop.permute.xlu0 %343
        %345 = vrot.lane.b32.xlu0 %v338, 16
        %v346 = vpop.permute.xlu0 %345
        %v347 = vsel %vm326, %v340, %v235
        %v348 = vsel %vm326, %v342, %v236
        %v349 = vsel %vm326, %v344, %v241
        %v350 = vsel %vm326, %v346, %v242
        %v351 = vsel %vm298, 1e+30, %v316
        %v352 = vsel %vm299, 1e+30, %v315
        %v353 = vsel %vm300, 1e+30, %v314
        %v354 = vsel %vm301, 1e+30, %v313
        %v355 = vmin.f32 %v235, %v351
        %v356 = vmin.f32 %v236, %v352
        %v357 = vmin.f32 %v241, %v353
        %v358 = vmin.f32 %v242, %v354
        %v359 = vsel %vm302, 1e+30, %v324
        %v360 = vsel %vm303, 1e+30, %v323
        %v361 = vsel %vm304, 1e+30, %v322
        %v362 = vsel %vm305, 1e+30, %v325
        %v363 = vmin.f32 %v355, %v359
        %v364 = vmin.f32 %v356, %v360
        %v365 = vmin.f32 %v357, %v361
        %v366 = vmin.f32 %v358, %v362
        %371 = vrot.lane.b32.xlu0 %v347, 113
        %v372 = vpop.permute.xlu0 %371
        %373 = vrot.lane.b32.xlu0 %v348, 113
        %v374 = vpop.permute.xlu0 %373
        %375 = vrot.lane.b32.xlu0 %v349, 113
        %v376 = vpop.permute.xlu0 %375
        %377 = vrot.lane.b32.xlu0 %v350, 113
        %v378 = vpop.permute.xlu0 %377
        %v383 = vsel %vm306, 1e+30, %v372
        %v384 = vsel %vm306, 1e+30, %v374
        %v385 = vsel %vm306, 1e+30, %v376
        %v386 = vsel %vm306, 1e+30, %v378
        %v387 = vmin.f32 %v235, %v383
        %v388 = vmin.f32 %v236, %v384
        %v389 = vmin.f32 %v241, %v385
        %v390 = vmin.f32 %v242, %v386
        %391 = vrot.lane.b32.xlu0 %v347, 127
        %v392 = vpop.permute.xlu0 %391
        %393 = vrot.lane.b32.xlu0 %v348, 127
        %v394 = vpop.permute.xlu0 %393
        %395 = vrot.lane.b32.xlu0 %v349, 127
        %v396 = vpop.permute.xlu0 %395
        %397 = vrot.lane.b32.xlu0 %v350, 127
        %v398 = vpop.permute.xlu0 %397
        %v403 = vsel %vm307, 1e+30, %v392
        %v404 = vsel %vm307, 1e+30, %v394
        %v405 = vsel %vm307, 1e+30, %v396
        %v406 = vsel %vm307, 1e+30, %v398
        %v407 = vmin.f32 %v387, %v403
        %v408 = vmin.f32 %v388, %v404
        %v409 = vmin.f32 %v389, %v405
        %v410 = vmin.f32 %v390, %v406
        %v411 = vmin.f32 %v363, %v407
        %v412 = vmin.f32 %v364, %v408
        %v413 = vmin.f32 %v365, %v409
        %v414 = vmin.f32 %v366, %v410
        %v415 = vrot.slane %v411, 7
        %v416 = vrot.slane %v412, 7
        %v417 = vrot.slane %v413, 7
        %v418 = vrot.slane %v414, 7
        %v419 = vsel %vm312, %v417, %v418
        %v420 = vsel %vm312, %v416, %v417
        %v421 = vsel %vm312, %v415, %v416
        %v422 = vsel %vm312, %v418, %v415
        %v423 = vrot.slane %v411, 1
        %v424 = vrot.slane %v412, 1
        %v425 = vrot.slane %v413, 1
        %v426 = vrot.slane %v414, 1
        %v427 = vsel %vm321, %v425, %v426
        %v428 = vsel %vm321, %v424, %v425
        %v429 = vsel %vm321, %v423, %v424
        %v430 = vsel %vm321, %v426, %v423
        %v431 = vsel %vm298, -1e+30, %v422
        %v432 = vsel %vm299, -1e+30, %v421
        %v433 = vsel %vm300, -1e+30, %v420
        %v434 = vsel %vm301, -1e+30, %v419
        %v435 = vmax.f32 %v411, %v431
        %v436 = vmax.f32 %v412, %v432
        %v437 = vmax.f32 %v413, %v433
        %v438 = vmax.f32 %v414, %v434
        %v439 = vsel %vm302, -1e+30, %v429
        %v440 = vsel %vm303, -1e+30, %v428
        %v441 = vsel %vm304, -1e+30, %v427
        %v442 = vsel %vm305, -1e+30, %v430
        %v443 = vmax.f32 %v435, %v439
        %v444 = vmax.f32 %v436, %v440
        %v445 = vmax.f32 %v437, %v441
        %v446 = vmax.f32 %v438, %v442
        %447 = vrot.lane.b32.xlu0 %v443, 16
        %v448 = vpop.permute.xlu0 %447
        %v449 = vsel %vm326, %v448, %v443
        %450 = vrot.lane.b32.xlu0 %v444, 16
        %v451 = vpop.permute.xlu0 %450
        %v452 = vsel %vm326, %v451, %v444
        %453 = vrot.lane.b32.xlu0 %v445, 16
        %v454 = vpop.permute.xlu0 %453
        %v455 = vsel %vm326, %v454, %v445
        %456 = vrot.lane.b32.xlu0 %v446, 16
        %v457 = vpop.permute.xlu0 %456
        %v458 = vsel %vm326, %v457, %v446
        %459 = vrot.lane.b32.xlu0 %v449, 16
        %v460 = vpop.permute.xlu0 %459
        %461 = vrot.lane.b32.xlu0 %v452, 16
        %v462 = vpop.permute.xlu0 %461
        %463 = vrot.lane.b32.xlu0 %v455, 16
        %v464 = vpop.permute.xlu0 %463
        %465 = vrot.lane.b32.xlu0 %v458, 16
        %v466 = vpop.permute.xlu0 %465
        %v467 = vsel %vm326, %v460, %v443
        %v468 = vsel %vm326, %v462, %v444
        %v469 = vsel %vm326, %v464, %v445
        %v470 = vsel %vm326, %v466, %v446
        %475 = vrot.lane.b32.xlu0 %v467, 113
        %v476 = vpop.permute.xlu0 %475
        %477 = vrot.lane.b32.xlu0 %v468, 113
        %v478 = vpop.permute.xlu0 %477
        %479 = vrot.lane.b32.xlu0 %v469, 113
        %v480 = vpop.permute.xlu0 %479
        %481 = vrot.lane.b32.xlu0 %v470, 113
        %v482 = vpop.permute.xlu0 %481
        %v487 = vsel %vm306, -1e+30, %v476
        %v488 = vsel %vm306, -1e+30, %v478
        %v489 = vsel %vm306, -1e+30, %v480
        %v490 = vsel %vm306, -1e+30, %v482
        %v491 = vmax.f32 %v443, %v487
        %v492 = vmax.f32 %v444, %v488
        %v493 = vmax.f32 %v445, %v489
        %v494 = vmax.f32 %v446, %v490
        %495 = vrot.lane.b32.xlu0 %v467, 127
        %v496 = vpop.permute.xlu0 %495
        %497 = vrot.lane.b32.xlu0 %v468, 127
        %v498 = vpop.permute.xlu0 %497
        %499 = vrot.lane.b32.xlu0 %v469, 127
        %v500 = vpop.permute.xlu0 %499
        %501 = vrot.lane.b32.xlu0 %v470, 127
        %v502 = vpop.permute.xlu0 %501
        %v507 = vsel %vm307, -1e+30, %v496
        %v508 = vsel %vm307, -1e+30, %v498
        %v509 = vsel %vm307, -1e+30, %v500
        %v510 = vsel %vm307, -1e+30, %v502
        %v511 = vmax.f32 %v491, %v507
        %v512 = vmax.f32 %v492, %v508
        %v513 = vmax.f32 %v493, %v509
        %v514 = vmax.f32 %v494, %v510
        %v515 = vsub.f32 %v235, %v511
        %v516 = vsub.f32 %v236, %v512
        %v517 = vsub.f32 %v241, %v513
        %v518 = vsub.f32 %v242, %v514
        %v519 = vmax.f32 %v515, 0.0
        %v520 = vmax.f32 %v516, 0.0
        %v521 = vmax.f32 %v517, 0.0
        %v522 = vmax.f32 %v518, 0.0
        %523 = vrot.lane.b32.xlu0 %v411, 16
        %v524 = vpop.permute.xlu0 %523
        %v525 = vsel %vm326, %v524, %v411
        %526 = vrot.lane.b32.xlu0 %v412, 16
        %v527 = vpop.permute.xlu0 %526
        %v528 = vsel %vm326, %v527, %v412
        %529 = vrot.lane.b32.xlu0 %v413, 16
        %v530 = vpop.permute.xlu0 %529
        %v531 = vsel %vm326, %v530, %v413
        %532 = vrot.lane.b32.xlu0 %v414, 16
        %v533 = vpop.permute.xlu0 %532
        %v534 = vsel %vm326, %v533, %v414
        %535 = vrot.lane.b32.xlu0 %v525, 16
        %v536 = vpop.permute.xlu0 %535
        %537 = vrot.lane.b32.xlu0 %v528, 16
        %v538 = vpop.permute.xlu0 %537
        %539 = vrot.lane.b32.xlu0 %v531, 16
        %v540 = vpop.permute.xlu0 %539
        %541 = vrot.lane.b32.xlu0 %v534, 16
        %v542 = vpop.permute.xlu0 %541
        %v543 = vsel %vm326, %v536, %v411
        %v544 = vsel %vm326, %v538, %v412
        %v545 = vsel %vm326, %v540, %v413
        %v546 = vsel %vm326, %v542, %v414
        %v547 = vsel %vm298, 1e+30, %v422
        %v548 = vsel %vm299, 1e+30, %v421
        %v549 = vsel %vm300, 1e+30, %v420
        %v550 = vsel %vm301, 1e+30, %v419
        %v551 = vmin.f32 %v411, %v547
        %v552 = vmin.f32 %v412, %v548
        %v553 = vmin.f32 %v413, %v549
        %v554 = vmin.f32 %v414, %v550
        %v555 = vsel %vm302, 1e+30, %v429
        %v556 = vsel %vm303, 1e+30, %v428
        %v557 = vsel %vm304, 1e+30, %v427
        %v558 = vsel %vm305, 1e+30, %v430
        %v559 = vmin.f32 %v551, %v555
        %v560 = vmin.f32 %v552, %v556
        %v561 = vmin.f32 %v553, %v557
        %v562 = vmin.f32 %v554, %v558
        %567 = vrot.lane.b32.xlu0 %v543, 113
        %v568 = vpop.permute.xlu0 %567
        %569 = vrot.lane.b32.xlu0 %v544, 113
        %v570 = vpop.permute.xlu0 %569
        %571 = vrot.lane.b32.xlu0 %v545, 113
        %v572 = vpop.permute.xlu0 %571
        %573 = vrot.lane.b32.xlu0 %v546, 113
        %v574 = vpop.permute.xlu0 %573
        %v579 = vsel %vm306, 1e+30, %v568
        %v580 = vsel %vm306, 1e+30, %v570
        %v581 = vsel %vm306, 1e+30, %v572
        %v582 = vsel %vm306, 1e+30, %v574
        %v583 = vmin.f32 %v411, %v579
        %v584 = vmin.f32 %v412, %v580
        %v585 = vmin.f32 %v413, %v581
        %v586 = vmin.f32 %v414, %v582
        %587 = vrot.lane.b32.xlu0 %v543, 127
        %v588 = vpop.permute.xlu0 %587
        %589 = vrot.lane.b32.xlu0 %v544, 127
        %v590 = vpop.permute.xlu0 %589
        %591 = vrot.lane.b32.xlu0 %v545, 127
        %v592 = vpop.permute.xlu0 %591
        %593 = vrot.lane.b32.xlu0 %v546, 127
        %v594 = vpop.permute.xlu0 %593
        %v599 = vsel %vm307, 1e+30, %v588
        %v600 = vsel %vm307, 1e+30, %v590
        %v601 = vsel %vm307, 1e+30, %v592
        %v602 = vsel %vm307, 1e+30, %v594
        %v603 = vmin.f32 %v583, %v599
        %v604 = vmin.f32 %v584, %v600
        %v605 = vmin.f32 %v585, %v601
        %v606 = vmin.f32 %v586, %v602
        %v607 = vmin.f32 %v559, %v603
        %v608 = vmin.f32 %v560, %v604
        %v609 = vmin.f32 %v561, %v605
        %v610 = vmin.f32 %v562, %v606
        %v611 = vrot.slane %v607, 7
        %v612 = vrot.slane %v608, 7
        %v613 = vrot.slane %v609, 7
        %v614 = vrot.slane %v610, 7
        %v615 = vsel %vm312, %v613, %v614
        %v616 = vsel %vm312, %v612, %v613
        %v617 = vsel %vm312, %v611, %v612
        %v618 = vsel %vm312, %v614, %v611
        %v619 = vrot.slane %v607, 1
        %v620 = vrot.slane %v608, 1
        %v621 = vrot.slane %v609, 1
        %v622 = vrot.slane %v610, 1
        %v623 = vsel %vm321, %v621, %v622
        %v624 = vsel %vm321, %v620, %v621
        %v625 = vsel %vm321, %v619, %v620
        %v626 = vsel %vm321, %v622, %v619
        %v627 = vsel %vm298, -1e+30, %v618
        %v628 = vsel %vm299, -1e+30, %v617
        %v629 = vsel %vm300, -1e+30, %v616
        %v630 = vsel %vm301, -1e+30, %v615
        %v631 = vmax.f32 %v607, %v627
        %v632 = vmax.f32 %v608, %v628
        %v633 = vmax.f32 %v609, %v629
        %v634 = vmax.f32 %v610, %v630
        %v635 = vsel %vm302, -1e+30, %v625
        %v636 = vsel %vm303, -1e+30, %v624
        %v637 = vsel %vm304, -1e+30, %v623
        %v638 = vsel %vm305, -1e+30, %v626
        %v639 = vmax.f32 %v631, %v635
        %v640 = vmax.f32 %v632, %v636
        %v641 = vmax.f32 %v633, %v637
        %v642 = vmax.f32 %v634, %v638
        %643 = vrot.lane.b32.xlu0 %v639, 16
        %v644 = vpop.permute.xlu0 %643
        %v645 = vsel %vm326, %v644, %v639
        %646 = vrot.lane.b32.xlu0 %v640, 16
        %v647 = vpop.permute.xlu0 %646
        %v648 = vsel %vm326, %v647, %v640
        %649 = vrot.lane.b32.xlu0 %v641, 16
        %v650 = vpop.permute.xlu0 %649
        %v651 = vsel %vm326, %v650, %v641
        %652 = vrot.lane.b32.xlu0 %v642, 16
        %v653 = vpop.permute.xlu0 %652
        %v654 = vsel %vm326, %v653, %v642
        %655 = vrot.lane.b32.xlu0 %v645, 16
        %v656 = vpop.permute.xlu0 %655
        %657 = vrot.lane.b32.xlu0 %v648, 16
        %v658 = vpop.permute.xlu0 %657
        %659 = vrot.lane.b32.xlu0 %v651, 16
        %v660 = vpop.permute.xlu0 %659
        %661 = vrot.lane.b32.xlu0 %v654, 16
        %v662 = vpop.permute.xlu0 %661
        %v663 = vsel %vm326, %v656, %v639
        %v664 = vsel %vm326, %v658, %v640
        %v665 = vsel %vm326, %v660, %v641
        %v666 = vsel %vm326, %v662, %v642
        %671 = vrot.lane.b32.xlu0 %v663, 113
        %v672 = vpop.permute.xlu0 %671
        %673 = vrot.lane.b32.xlu0 %v664, 113
        %v674 = vpop.permute.xlu0 %673
        %675 = vrot.lane.b32.xlu0 %v665, 113
        %v676 = vpop.permute.xlu0 %675
        %677 = vrot.lane.b32.xlu0 %v666, 113
        %v678 = vpop.permute.xlu0 %677
        %v683 = vsel %vm306, -1e+30, %v672
        %v684 = vsel %vm306, -1e+30, %v674
        %v685 = vsel %vm306, -1e+30, %v676
        %v686 = vsel %vm306, -1e+30, %v678
        %v687 = vmax.f32 %v639, %v683
        %v688 = vmax.f32 %v640, %v684
        %v689 = vmax.f32 %v641, %v685
        %v690 = vmax.f32 %v642, %v686
        %691 = vrot.lane.b32.xlu0 %v663, 127
        %v692 = vpop.permute.xlu0 %691
        %693 = vrot.lane.b32.xlu0 %v664, 127
        %v694 = vpop.permute.xlu0 %693
        %695 = vrot.lane.b32.xlu0 %v665, 127
        %v696 = vpop.permute.xlu0 %695
        %697 = vrot.lane.b32.xlu0 %v666, 127
        %v698 = vpop.permute.xlu0 %697
        %v703 = vsel %vm307, -1e+30, %v692
        %v704 = vsel %vm307, -1e+30, %v694
        %v705 = vsel %vm307, -1e+30, %v696
        %v706 = vsel %vm307, -1e+30, %v698
        %v707 = vmax.f32 %v687, %v703
        %v708 = vmax.f32 %v688, %v704
        %v709 = vmax.f32 %v689, %v705
        %v710 = vmax.f32 %v690, %v706
        %v711 = vsub.f32 %v411, %v707
        %v712 = vsub.f32 %v412, %v708
        %v713 = vsub.f32 %v413, %v709
        %v714 = vsub.f32 %v414, %v710
        %v715 = vmax.f32 %v711, 0.0
        %v716 = vmax.f32 %v712, 0.0
        %v717 = vmax.f32 %v713, 0.0
        %v718 = vmax.f32 %v714, 0.0
        %v719 = vmul.f32 %v519, %v715
        %v720 = vmul.f32 %v520, %v716
        %v721 = vmul.f32 %v521, %v717
        %v722 = vmul.f32 %v522, %v718
        %v723 = vsub.f32 %v715, %v719
        %v724 = vsub.f32 %v716, %v720
        %v725 = vsub.f32 %v717, %v721
        %v726 = vsub.f32 %v718, %v722
        %v727 = vmax.f32 %v723, 0.0
        %v728 = vmax.f32 %v724, 0.0
        %v729 = vmax.f32 %v725, 0.0
        %v730 = vmax.f32 %v726, 0.0
        %v731 = vadd.f32 %v519, %v727
        %v732 = vadd.f32 %v520, %v728
        %v733 = vadd.f32 %v521, %v729
        %v734 = vadd.f32 %v522, %v730
        %735 = vrot.lane.b32.xlu0 %v607, 16
        %v736 = vpop.permute.xlu0 %735
        %v737 = vsel %vm326, %v736, %v607
        %738 = vrot.lane.b32.xlu0 %v608, 16
        %v739 = vpop.permute.xlu0 %738
        %v740 = vsel %vm326, %v739, %v608
        %741 = vrot.lane.b32.xlu0 %v609, 16
        %v742 = vpop.permute.xlu0 %741
        %v743 = vsel %vm326, %v742, %v609
        %744 = vrot.lane.b32.xlu0 %v610, 16
        %v745 = vpop.permute.xlu0 %744
        %v746 = vsel %vm326, %v745, %v610
        %747 = vrot.lane.b32.xlu0 %v737, 16
        %v748 = vpop.permute.xlu0 %747
        %749 = vrot.lane.b32.xlu0 %v740, 16
        %v750 = vpop.permute.xlu0 %749
        %751 = vrot.lane.b32.xlu0 %v743, 16
        %v752 = vpop.permute.xlu0 %751
        %753 = vrot.lane.b32.xlu0 %v746, 16
        %v754 = vpop.permute.xlu0 %753
        %v755 = vsel %vm326, %v748, %v607
        %v756 = vsel %vm326, %v750, %v608
        %v757 = vsel %vm326, %v752, %v609
        %v758 = vsel %vm326, %v754, %v610
        %v759 = vsel %vm298, 1e+30, %v618
        %v760 = vsel %vm299, 1e+30, %v617
        %v761 = vsel %vm300, 1e+30, %v616
        %v762 = vsel %vm301, 1e+30, %v615
        %v763 = vmin.f32 %v607, %v759
        %v764 = vmin.f32 %v608, %v760
        %v765 = vmin.f32 %v609, %v761
        %v766 = vmin.f32 %v610, %v762
        %v767 = vsel %vm302, 1e+30, %v625
        %v768 = vsel %vm303, 1e+30, %v624
        %v769 = vsel %vm304, 1e+30, %v623
        %v770 = vsel %vm305, 1e+30, %v626
        %v771 = vmin.f32 %v763, %v767
        %v772 = vmin.f32 %v764, %v768
        %v773 = vmin.f32 %v765, %v769
        %v774 = vmin.f32 %v766, %v770
        %779 = vrot.lane.b32.xlu0 %v755, 113
        %v780 = vpop.permute.xlu0 %779
        %781 = vrot.lane.b32.xlu0 %v756, 113
        %v782 = vpop.permute.xlu0 %781
        %783 = vrot.lane.b32.xlu0 %v757, 113
        %v784 = vpop.permute.xlu0 %783
        %785 = vrot.lane.b32.xlu0 %v758, 113
        %v786 = vpop.permute.xlu0 %785
        %v791 = vsel %vm306, 1e+30, %v780
        %v792 = vsel %vm306, 1e+30, %v782
        %v793 = vsel %vm306, 1e+30, %v784
        %v794 = vsel %vm306, 1e+30, %v786
        %v795 = vmin.f32 %v607, %v791
        %v796 = vmin.f32 %v608, %v792
        %v797 = vmin.f32 %v609, %v793
        %v798 = vmin.f32 %v610, %v794
        %799 = vrot.lane.b32.xlu0 %v755, 127
        %v800 = vpop.permute.xlu0 %799
        %801 = vrot.lane.b32.xlu0 %v756, 127
        %v802 = vpop.permute.xlu0 %801
        %803 = vrot.lane.b32.xlu0 %v757, 127
        %v804 = vpop.permute.xlu0 %803
        %805 = vrot.lane.b32.xlu0 %v758, 127
        %v806 = vpop.permute.xlu0 %805
        %v811 = vsel %vm307, 1e+30, %v800
        %v812 = vsel %vm307, 1e+30, %v802
        %v813 = vsel %vm307, 1e+30, %v804
        %v814 = vsel %vm307, 1e+30, %v806
        %v815 = vmin.f32 %v795, %v811
        %v816 = vmin.f32 %v796, %v812
        %v817 = vmin.f32 %v797, %v813
        %v818 = vmin.f32 %v798, %v814
        %v819 = vmin.f32 %v771, %v815
        %v820 = vmin.f32 %v772, %v816
        %v821 = vmin.f32 %v773, %v817
        %v822 = vmin.f32 %v774, %v818
        %v823 = vrot.slane %v819, 7
        %v824 = vrot.slane %v820, 7
        %v825 = vrot.slane %v821, 7
        %v826 = vrot.slane %v822, 7
        %v827 = vsel %vm312, %v825, %v826
        %v828 = vsel %vm312, %v824, %v825
        %v829 = vsel %vm312, %v823, %v824
        %v830 = vsel %vm312, %v826, %v823
        %v831 = vrot.slane %v819, 1
        %v832 = vrot.slane %v820, 1
        %v833 = vrot.slane %v821, 1
        %v834 = vrot.slane %v822, 1
        %v835 = vsel %vm321, %v833, %v834
        %v836 = vsel %vm321, %v832, %v833
        %v837 = vsel %vm321, %v831, %v832
        %v838 = vsel %vm321, %v834, %v831
        %v839 = vsel %vm298, -1e+30, %v830
        %v840 = vsel %vm299, -1e+30, %v829
        %v841 = vsel %vm300, -1e+30, %v828
        %v842 = vsel %vm301, -1e+30, %v827
        %v843 = vmax.f32 %v819, %v839
        %v844 = vmax.f32 %v820, %v840
        %v845 = vmax.f32 %v821, %v841
        %v846 = vmax.f32 %v822, %v842
        %v847 = vsel %vm302, -1e+30, %v837
        %v848 = vsel %vm303, -1e+30, %v836
        %v849 = vsel %vm304, -1e+30, %v835
        %v850 = vsel %vm305, -1e+30, %v838
        %v851 = vmax.f32 %v843, %v847
        %v852 = vmax.f32 %v844, %v848
        %v853 = vmax.f32 %v845, %v849
        %v854 = vmax.f32 %v846, %v850
        %855 = vrot.lane.b32.xlu0 %v851, 16
        %v856 = vpop.permute.xlu0 %855
        %v857 = vsel %vm326, %v856, %v851
        %858 = vrot.lane.b32.xlu0 %v852, 16
        %v859 = vpop.permute.xlu0 %858
        %v860 = vsel %vm326, %v859, %v852
        %861 = vrot.lane.b32.xlu0 %v853, 16
        %v862 = vpop.permute.xlu0 %861
        %v863 = vsel %vm326, %v862, %v853
        %864 = vrot.lane.b32.xlu0 %v854, 16
        %v865 = vpop.permute.xlu0 %864
        %v866 = vsel %vm326, %v865, %v854
        %867 = vrot.lane.b32.xlu0 %v857, 16
        %v868 = vpop.permute.xlu0 %867
        %869 = vrot.lane.b32.xlu0 %v860, 16
        %v870 = vpop.permute.xlu0 %869
        %871 = vrot.lane.b32.xlu0 %v863, 16
        %v872 = vpop.permute.xlu0 %871
        %873 = vrot.lane.b32.xlu0 %v866, 16
        %v874 = vpop.permute.xlu0 %873
        %v875 = vsel %vm326, %v868, %v851
        %v876 = vsel %vm326, %v870, %v852
        %v877 = vsel %vm326, %v872, %v853
        %v878 = vsel %vm326, %v874, %v854
        %883 = vrot.lane.b32.xlu0 %v875, 113
        %v884 = vpop.permute.xlu0 %883
        %885 = vrot.lane.b32.xlu0 %v876, 113
        %v886 = vpop.permute.xlu0 %885
        %887 = vrot.lane.b32.xlu0 %v877, 113
        %v888 = vpop.permute.xlu0 %887
        %889 = vrot.lane.b32.xlu0 %v878, 113
        %v890 = vpop.permute.xlu0 %889
        %v895 = vsel %vm306, -1e+30, %v884
        %v896 = vsel %vm306, -1e+30, %v886
        %v897 = vsel %vm306, -1e+30, %v888
        %v898 = vsel %vm306, -1e+30, %v890
        %v899 = vmax.f32 %v851, %v895
        %v900 = vmax.f32 %v852, %v896
        %v901 = vmax.f32 %v853, %v897
        %v902 = vmax.f32 %v854, %v898
        %903 = vrot.lane.b32.xlu0 %v875, 127
        %v904 = vpop.permute.xlu0 %903
        %905 = vrot.lane.b32.xlu0 %v876, 127
        %v906 = vpop.permute.xlu0 %905
        %907 = vrot.lane.b32.xlu0 %v877, 127
        %v908 = vpop.permute.xlu0 %907
        %909 = vrot.lane.b32.xlu0 %v878, 127
        %v910 = vpop.permute.xlu0 %909
        %v915 = vsel %vm307, -1e+30, %v904
        %v916 = vsel %vm307, -1e+30, %v906
        %v917 = vsel %vm307, -1e+30, %v908
        %v918 = vsel %vm307, -1e+30, %v910
        %v919 = vmax.f32 %v899, %v915
        %v920 = vmax.f32 %v900, %v916
        %v921 = vmax.f32 %v901, %v917
        %v922 = vmax.f32 %v902, %v918
        %v923 = vsub.f32 %v607, %v919
        %v924 = vsub.f32 %v608, %v920
        %v925 = vsub.f32 %v609, %v921
        %v926 = vsub.f32 %v610, %v922
        %v927 = vmax.f32 %v923, 0.0
        %v928 = vmax.f32 %v924, 0.0
        %v929 = vmax.f32 %v925, 0.0
        %v930 = vmax.f32 %v926, 0.0
        %v931 = vmul.f32 %v731, %v927
        %v932 = vmul.f32 %v732, %v928
        %v933 = vmul.f32 %v733, %v929
        %v934 = vmul.f32 %v734, %v930
        %v935 = vsub.f32 %v927, %v931
        %v936 = vsub.f32 %v928, %v932
        %v937 = vsub.f32 %v929, %v933
        %v938 = vsub.f32 %v930, %v934
        %v939 = vmax.f32 %v935, 0.0
        %v940 = vmax.f32 %v936, 0.0
        %v941 = vmax.f32 %v937, 0.0
        %v942 = vmax.f32 %v938, 0.0
        %v943 = vadd.f32 %v731, %v939
        %v944 = vadd.f32 %v732, %v940
        %v945 = vadd.f32 %v733, %v941
        %v946 = vadd.f32 %v734, %v942
        %947 = vrot.lane.b32.xlu0 %v819, 16
        %v948 = vpop.permute.xlu0 %947
        %v949 = vsel %vm326, %v948, %v819
        %950 = vrot.lane.b32.xlu0 %v820, 16
        %v951 = vpop.permute.xlu0 %950
        %v952 = vsel %vm326, %v951, %v820
        %953 = vrot.lane.b32.xlu0 %v821, 16
        %v954 = vpop.permute.xlu0 %953
        %v955 = vsel %vm326, %v954, %v821
        %956 = vrot.lane.b32.xlu0 %v822, 16
        %v957 = vpop.permute.xlu0 %956
        %v958 = vsel %vm326, %v957, %v822
        %959 = vrot.lane.b32.xlu0 %v949, 16
        %v960 = vpop.permute.xlu0 %959
        %961 = vrot.lane.b32.xlu0 %v952, 16
        %v962 = vpop.permute.xlu0 %961
        %963 = vrot.lane.b32.xlu0 %v955, 16
        %v964 = vpop.permute.xlu0 %963
        %965 = vrot.lane.b32.xlu0 %v958, 16
        %v966 = vpop.permute.xlu0 %965
        %v967 = vsel %vm326, %v960, %v819
        %v968 = vsel %vm326, %v962, %v820
        %v969 = vsel %vm326, %v964, %v821
        %v970 = vsel %vm326, %v966, %v822
        %v971 = vsel %vm298, 1e+30, %v830
        %v972 = vsel %vm299, 1e+30, %v829
        %v973 = vsel %vm300, 1e+30, %v828
        %v974 = vsel %vm301, 1e+30, %v827
        %v975 = vmin.f32 %v819, %v971
        %v976 = vmin.f32 %v820, %v972
        %v977 = vmin.f32 %v821, %v973
        %v978 = vmin.f32 %v822, %v974
        %v979 = vsel %vm302, 1e+30, %v837
        %v980 = vsel %vm303, 1e+30, %v836
        %v981 = vsel %vm304, 1e+30, %v835
        %v982 = vsel %vm305, 1e+30, %v838
        %v983 = vmin.f32 %v975, %v979
        %v984 = vmin.f32 %v976, %v980
        %v985 = vmin.f32 %v977, %v981
        %v986 = vmin.f32 %v978, %v982
        %991 = vrot.lane.b32.xlu0 %v967, 113
        %v992 = vpop.permute.xlu0 %991
        %993 = vrot.lane.b32.xlu0 %v968, 113
        %v994 = vpop.permute.xlu0 %993
        %995 = vrot.lane.b32.xlu0 %v969, 113
        %v996 = vpop.permute.xlu0 %995
        %997 = vrot.lane.b32.xlu0 %v970, 113
        %v998 = vpop.permute.xlu0 %997
        %v1003 = vsel %vm306, 1e+30, %v992
        %v1004 = vsel %vm306, 1e+30, %v994
        %v1005 = vsel %vm306, 1e+30, %v996
        %v1006 = vsel %vm306, 1e+30, %v998
        %v1007 = vmin.f32 %v819, %v1003
        %v1008 = vmin.f32 %v820, %v1004
        %v1009 = vmin.f32 %v821, %v1005
        %v1010 = vmin.f32 %v822, %v1006
        %1011 = vrot.lane.b32.xlu0 %v967, 127
        %v1012 = vpop.permute.xlu0 %1011
        %1013 = vrot.lane.b32.xlu0 %v968, 127
        %v1014 = vpop.permute.xlu0 %1013
        %1015 = vrot.lane.b32.xlu0 %v969, 127
        %v1016 = vpop.permute.xlu0 %1015
        %1017 = vrot.lane.b32.xlu0 %v970, 127
        %v1018 = vpop.permute.xlu0 %1017
        %v1023 = vsel %vm307, 1e+30, %v1012
        %v1024 = vsel %vm307, 1e+30, %v1014
        %v1025 = vsel %vm307, 1e+30, %v1016
        %v1026 = vsel %vm307, 1e+30, %v1018
        %v1027 = vmin.f32 %v1007, %v1023
        %v1028 = vmin.f32 %v1008, %v1024
        %v1029 = vmin.f32 %v1009, %v1025
        %v1030 = vmin.f32 %v1010, %v1026
        %v1031 = vmin.f32 %v983, %v1027
        %v1032 = vmin.f32 %v984, %v1028
        %v1033 = vmin.f32 %v985, %v1029
        %v1034 = vmin.f32 %v986, %v1030
        %v1035 = vrot.slane %v1031, 7
        %v1036 = vrot.slane %v1032, 7
        %v1037 = vrot.slane %v1033, 7
        %v1038 = vrot.slane %v1034, 7
        %v1039 = vsel %vm312, %v1037, %v1038
        %v1040 = vsel %vm312, %v1036, %v1037
        %v1041 = vsel %vm312, %v1035, %v1036
        %v1042 = vsel %vm312, %v1038, %v1035
        %v1043 = vrot.slane %v1031, 1
        %v1044 = vrot.slane %v1032, 1
        %v1045 = vrot.slane %v1033, 1
        %v1046 = vrot.slane %v1034, 1
        %v1047 = vsel %vm321, %v1045, %v1046
        %v1048 = vsel %vm321, %v1044, %v1045
        %v1049 = vsel %vm321, %v1043, %v1044
        %v1050 = vsel %vm321, %v1046, %v1043
        %v1051 = vsel %vm298, -1e+30, %v1042
        %v1052 = vsel %vm299, -1e+30, %v1041
        %v1053 = vsel %vm300, -1e+30, %v1040
        %v1054 = vsel %vm301, -1e+30, %v1039
        %v1055 = vmax.f32 %v1031, %v1051
        %v1056 = vmax.f32 %v1032, %v1052
        %v1057 = vmax.f32 %v1033, %v1053
        %v1058 = vmax.f32 %v1034, %v1054
        %v1059 = vsel %vm302, -1e+30, %v1049
        %v1060 = vsel %vm303, -1e+30, %v1048
        %v1061 = vsel %vm304, -1e+30, %v1047
        %v1062 = vsel %vm305, -1e+30, %v1050
        %v1063 = vmax.f32 %v1055, %v1059
        %v1064 = vmax.f32 %v1056, %v1060
        %v1065 = vmax.f32 %v1057, %v1061
        %v1066 = vmax.f32 %v1058, %v1062
        %1067 = vrot.lane.b32.xlu0 %v1063, 16
        %v1068 = vpop.permute.xlu0 %1067
        %v1069 = vsel %vm326, %v1068, %v1063
        %1070 = vrot.lane.b32.xlu0 %v1064, 16
        %v1071 = vpop.permute.xlu0 %1070
        %v1072 = vsel %vm326, %v1071, %v1064
        %1073 = vrot.lane.b32.xlu0 %v1065, 16
        %v1074 = vpop.permute.xlu0 %1073
        %v1075 = vsel %vm326, %v1074, %v1065
        %1076 = vrot.lane.b32.xlu0 %v1066, 16
        %v1077 = vpop.permute.xlu0 %1076
        %v1078 = vsel %vm326, %v1077, %v1066
        %1079 = vrot.lane.b32.xlu0 %v1069, 16
        %v1080 = vpop.permute.xlu0 %1079
        %1081 = vrot.lane.b32.xlu0 %v1072, 16
        %v1082 = vpop.permute.xlu0 %1081
        %1083 = vrot.lane.b32.xlu0 %v1075, 16
        %v1084 = vpop.permute.xlu0 %1083
        %1085 = vrot.lane.b32.xlu0 %v1078, 16
        %v1086 = vpop.permute.xlu0 %1085
        %v1087 = vsel %vm326, %v1080, %v1063
        %v1088 = vsel %vm326, %v1082, %v1064
        %v1089 = vsel %vm326, %v1084, %v1065
        %v1090 = vsel %vm326, %v1086, %v1066
        %1095 = vrot.lane.b32.xlu0 %v1087, 113
        %v1096 = vpop.permute.xlu0 %1095
        %1097 = vrot.lane.b32.xlu0 %v1088, 113
        %v1098 = vpop.permute.xlu0 %1097
        %1099 = vrot.lane.b32.xlu0 %v1089, 113
        %v1100 = vpop.permute.xlu0 %1099
        %1101 = vrot.lane.b32.xlu0 %v1090, 113
        %v1102 = vpop.permute.xlu0 %1101
        %v1107 = vsel %vm306, -1e+30, %v1096
        %v1108 = vsel %vm306, -1e+30, %v1098
        %v1109 = vsel %vm306, -1e+30, %v1100
        %v1110 = vsel %vm306, -1e+30, %v1102
        %v1111 = vmax.f32 %v1063, %v1107
        %v1112 = vmax.f32 %v1064, %v1108
        %v1113 = vmax.f32 %v1065, %v1109
        %v1114 = vmax.f32 %v1066, %v1110
        %1115 = vrot.lane.b32.xlu0 %v1087, 127
        %v1116 = vpop.permute.xlu0 %1115
        %1117 = vrot.lane.b32.xlu0 %v1088, 127
        %v1118 = vpop.permute.xlu0 %1117
        %1119 = vrot.lane.b32.xlu0 %v1089, 127
        %v1120 = vpop.permute.xlu0 %1119
        %1121 = vrot.lane.b32.xlu0 %v1090, 127
        %v1122 = vpop.permute.xlu0 %1121
        %v1127 = vsel %vm307, -1e+30, %v1116
        %v1128 = vsel %vm307, -1e+30, %v1118
        %v1129 = vsel %vm307, -1e+30, %v1120
        %v1130 = vsel %vm307, -1e+30, %v1122
        %v1131 = vmax.f32 %v1111, %v1127
        %v1132 = vmax.f32 %v1112, %v1128
        %v1133 = vmax.f32 %v1113, %v1129
        %v1134 = vmax.f32 %v1114, %v1130
        %v1135 = vsub.f32 %v819, %v1131
        %v1136 = vsub.f32 %v820, %v1132
        %v1137 = vsub.f32 %v821, %v1133
        %v1138 = vsub.f32 %v822, %v1134
        %v1139 = vmax.f32 %v1135, 0.0
        %v1140 = vmax.f32 %v1136, 0.0
        %v1141 = vmax.f32 %v1137, 0.0
        %v1142 = vmax.f32 %v1138, 0.0
        %v1143 = vmul.f32 %v943, %v1139
        %v1144 = vmul.f32 %v944, %v1140
        %v1145 = vmul.f32 %v945, %v1141
        %v1146 = vmul.f32 %v946, %v1142
        %v1147 = vsub.f32 %v1139, %v1143
        %v1148 = vsub.f32 %v1140, %v1144
        %v1149 = vsub.f32 %v1141, %v1145
        %v1150 = vsub.f32 %v1142, %v1146
        %v1151 = vmax.f32 %v1147, 0.0
        %v1152 = vmax.f32 %v1148, 0.0
        %v1153 = vmax.f32 %v1149, 0.0
        %v1154 = vmax.f32 %v1150, 0.0
        %v1155 = vadd.f32 %v943, %v1151
        %v1156 = vadd.f32 %v944, %v1152
        %v1157 = vadd.f32 %v945, %v1153
        %v1158 = vadd.f32 %v946, %v1154
        %vm1159 = vcmask 130048
        %v1161 = vsel %vm1159, %v235, 0
        %v1164 = vsel %vm1159, %v236, 0
        %v1167 = vsel %vm1159, %v241, 0
        %v1170 = vsel %vm1159, %v242, 0
        %1172 = vmatprep.subr.mxu0 0.0
        %1173 = vmatpush1.msra.mxu0 0.0
        %1174 = vmatprep.subr.mxu0 0.0
        %1175 = vmatpush1.msra.mxu0 0.0
        %1176 = vmatprep.subr.mxu0 0.0
        %1177 = vmatpush1.msra.mxu0 0.0
        %1178 = vmatprep.subr.mxu0 0.0
        %1179 = vmatpush1.msra.mxu0 0.0
        %1180 = vmatprep.subr.mxu0 0.0
        %1181 = vmatpush1.msra.mxu0 0.0
        %1182 = vmatprep.subr.mxu0 0.0
        %1183 = vmatpush1.msra.mxu0 0.0
        %1184 = vmatprep.subr.mxu0 0.0
        %1185 = vmatpush1.msra.mxu0 0.0
        %1186 = vmatprep.subr.mxu0 0.0
        %1187 = vmatpush1.msra.mxu0 0.0
        %1188 = vmatprep.subr.mxu0 0.0
        %1189 = vmatpush1.msra.mxu0 0.0
        %1190 = vmatprep.subr.mxu0 0.0
        %1191 = vmatpush1.msra.mxu0 0.0
        %1192 = vmatprep.subr.mxu0 0.0
        %1193 = vmatpush1.msra.mxu0 0.0
        %1194 = vmatprep.subr.mxu0 0.0
        %1195 = vmatpush1.msra.mxu0 0.0
        %1196 = vmatprep.subr.mxu0 0.0
        %1197 = vmatpush1.msra.mxu0 0.0
        %1198 = vmatprep.subr.mxu0 0.0
        %1199 = vmatpush1.msra.mxu0 0.0
        %1200 = vmatprep.subr.mxu0 0.0
        %1201 = vmatpush1.msra.mxu0 1.0
        %1202 = vmatprep.subr.mxu0 0.0
        %1203 = vmatpush1.msra.mxu0 1.0
        %1204 = vmatprep.subr.mxu0 0.0
        %1205 = vmatpush2.msra.mxu0 0.0
        %1206 = vmatprep.subr.mxu0 0.0
        %1207 = vmatpush2.msra.mxu0 0.0
        %1208 = vmatprep.subr.mxu0 0.0
        %1209 = vmatpush2.msra.mxu0 0.0
        %1210 = vmatprep.subr.mxu0 0.0
        %1211 = vmatpush2.msra.mxu0 0.0
        %1212 = vmatprep.subr.mxu0 0.0
        %1213 = vmatpush2.msra.mxu0 0.0
        %1214 = vmatprep.subr.mxu0 0.0
        %1215 = vmatpush2.msra.mxu0 0.0
        %1216 = vmatprep.subr.mxu0 0.0
        %1217 = vmatpush2.msra.mxu0 0.0
        %1218 = vmatprep.subr.mxu0 0.0
        %1219 = vmatpush2.msra.mxu0 0.0
        %1220 = vmatprep.subr.mxu0 0.0
        %1221 = vmatpush2.msra.mxu0 0.0
        %1222 = vmatprep.subr.mxu0 0.0
        %1223 = vmatpush2.msra.mxu0 0.0
        %1224 = vmatprep.subr.mxu0 0.0
        %1225 = vmatpush2.msra.mxu0 0.0
        %1226 = vmatprep.subr.mxu0 0.0
        %1227 = vmatpush2.msra.mxu0 0.0
        %1228 = vmatprep.subr.mxu0 0.0
        %1229 = vmatpush2.msra.mxu0 0.0
        %1230 = vmatprep.subr.mxu0 0.0
        %1231 = vmatpush2.msra.mxu0 0.0
        %1232 = vmatprep.subr.mxu0 0.0
        %1233 = vmatpush2.msra.mxu0 0.0
        %1234 = vmatprep.subr.mxu0 0.0
        %1235 = vmatpush2.msra.mxu0 0.0
        %1236 = vmatprep.mubr.f32.mxu0 0.0
        %1237 = vmatmul.mubr.f32.gmra.mxu0 %v1161
        %v1238 = vpop.f32.mrf.mxu0
        %v1239 = vadd.f32 0.0, %v1238
        %v1240 = vpop.f32.mrf.mxu0
        %1241 = vmatprep.mubr.f32.mxu0 0.0
        %1242 = vmatmul.mubr.f32.gmra.mxu0 %v1164
        %v1243 = vpop.f32.mrf.mxu0
        %v1244 = vadd.f32 0.0, %v1243
        %v1245 = vpop.f32.mrf.mxu0
        %1246 = vmatprep.mubr.f32.mxu0 0.0
        %1247 = vmatmul.mubr.f32.gmra.mxu0 %v1167
        %v1248 = vpop.f32.mrf.mxu0
        %v1249 = vadd.f32 0.0, %v1248
        %v1250 = vpop.f32.mrf.mxu0
        %1251 = vmatprep.mubr.f32.mxu0 0.0
        %1252 = vmatmul.mubr.f32.gmra.mxu0 %v1170
        %v1253 = vpop.f32.mrf.mxu0
        %v1254 = vadd.f32 0.0, %v1253
        %v1255 = vpop.f32.mrf.mxu0
        %1256 = vdwg.mxu0
        %v1258 = vsel %vm1159, %v1155, 0
        %v1261 = vsel %vm1159, %v1156, 0
        %v1264 = vsel %vm1159, %v1157, 0
        %v1267 = vsel %vm1159, %v1158, 0
        %1269 = vmatprep.subr.mxu0 0.0
        %1270 = vmatpush1.msra.mxu0 0.0
        %1271 = vmatprep.subr.mxu0 0.0
        %1272 = vmatpush1.msra.mxu0 0.0
        %1273 = vmatprep.subr.mxu0 0.0
        %1274 = vmatpush1.msra.mxu0 0.0
        %1275 = vmatprep.subr.mxu0 0.0
        %1276 = vmatpush1.msra.mxu0 0.0
        %1277 = vmatprep.subr.mxu0 0.0
        %1278 = vmatpush1.msra.mxu0 0.0
        %1279 = vmatprep.subr.mxu0 0.0
        %1280 = vmatpush1.msra.mxu0 0.0
        %1281 = vmatprep.subr.mxu0 0.0
        %1282 = vmatpush1.msra.mxu0 0.0
        %1283 = vmatprep.subr.mxu0 0.0
        %1284 = vmatpush1.msra.mxu0 0.0
        %1285 = vmatprep.subr.mxu0 0.0
        %1286 = vmatpush1.msra.mxu0 0.0
        %1287 = vmatprep.subr.mxu0 0.0
        %1288 = vmatpush1.msra.mxu0 0.0
        %1289 = vmatprep.subr.mxu0 0.0
        %1290 = vmatpush1.msra.mxu0 0.0
        %1291 = vmatprep.subr.mxu0 0.0
        %1292 = vmatpush1.msra.mxu0 0.0
        %1293 = vmatprep.subr.mxu0 0.0
        %1294 = vmatpush1.msra.mxu0 0.0
        %1295 = vmatprep.subr.mxu0 0.0
        %1296 = vmatpush1.msra.mxu0 0.0
        %1297 = vmatprep.subr.mxu0 0.0
        %1298 = vmatpush1.msra.mxu0 1.0
        %1299 = vmatprep.subr.mxu0 0.0
        %1300 = vmatpush1.msra.mxu0 1.0
        %1301 = vmatprep.subr.mxu0 0.0
        %1302 = vmatpush2.msra.mxu0 0.0
        %1303 = vmatprep.subr.mxu0 0.0
        %1304 = vmatpush2.msra.mxu0 0.0
        %1305 = vmatprep.subr.mxu0 0.0
        %1306 = vmatpush2.msra.mxu0 0.0
        %1307 = vmatprep.subr.mxu0 0.0
        %1308 = vmatpush2.msra.mxu0 0.0
        %1309 = vmatprep.subr.mxu0 0.0
        %1310 = vmatpush2.msra.mxu0 0.0
        %1311 = vmatprep.subr.mxu0 0.0
        %1312 = vmatpush2.msra.mxu0 0.0
        %1313 = vmatprep.subr.mxu0 0.0
        %1314 = vmatpush2.msra.mxu0 0.0
        %1315 = vmatprep.subr.mxu0 0.0
        %1316 = vmatpush2.msra.mxu0 0.0
        %1317 = vmatprep.subr.mxu0 0.0
        %1318 = vmatpush2.msra.mxu0 0.0
        %1319 = vmatprep.subr.mxu0 0.0
        %1320 = vmatpush2.msra.mxu0 0.0
        %1321 = vmatprep.subr.mxu0 0.0
        %1322 = vmatpush2.msra.mxu0 0.0
        %1323 = vmatprep.subr.mxu0 0.0
        %1324 = vmatpush2.msra.mxu0 0.0
        %1325 = vmatprep.subr.mxu0 0.0
        %1326 = vmatpush2.msra.mxu0 0.0
        %1327 = vmatprep.subr.mxu0 0.0
        %1328 = vmatpush2.msra.mxu0 0.0
        %1329 = vmatprep.subr.mxu0 0.0
        %1330 = vmatpush2.msra.mxu0 0.0
        %1331 = vmatprep.subr.mxu0 0.0
        %1332 = vmatpush2.msra.mxu0 0.0
        %1333 = vmatprep.mubr.f32.mxu0 0.0
        %1334 = vmatmul.mubr.f32.gmra.mxu0 %v1258
        %v1335 = vpop.f32.mrf.mxu0
        %v1336 = vadd.f32 0.0, %v1335
        %v1337 = vpop.f32.mrf.mxu0
        %1338 = vmatprep.mubr.f32.mxu0 0.0
        %1339 = vmatmul.mubr.f32.gmra.mxu0 %v1261
        %v1340 = vpop.f32.mrf.mxu0
        %v1341 = vadd.f32 0.0, %v1340
        %v1342 = vpop.f32.mrf.mxu0
        %1343 = vmatprep.mubr.f32.mxu0 0.0
        %1344 = vmatmul.mubr.f32.gmra.mxu0 %v1264
        %v1345 = vpop.f32.mrf.mxu0
        %v1346 = vadd.f32 0.0, %v1345
        %v1347 = vpop.f32.mrf.mxu0
        %1348 = vmatprep.mubr.f32.mxu0 0.0
        %1349 = vmatmul.mubr.f32.gmra.mxu0 %v1267
        %v1350 = vpop.f32.mrf.mxu0
        %v1351 = vadd.f32 0.0, %v1350
        %v1352 = vpop.f32.mrf.mxu0
        %1353 = vdwg.mxu0
        %v1354 = vmul.f32 %v1155, %v241
        %v1355 = vmul.f32 %v1156, %v242
        %v1356 = vmul.f32 %v1157, %v235
        %v1357 = vmul.f32 %v1158, %v236
        %v1359 = vsel %vm1159, %v1354, 0
        %v1362 = vsel %vm1159, %v1355, 0
        %v1365 = vsel %vm1159, %v1356, 0
        %v1368 = vsel %vm1159, %v1357, 0
        %1370 = vmatprep.subr.mxu0 0.0
        %1371 = vmatpush1.msra.mxu0 0.0
        %1372 = vmatprep.subr.mxu0 0.0
        %1373 = vmatpush1.msra.mxu0 0.0
        %1374 = vmatprep.subr.mxu0 0.0
        %1375 = vmatpush1.msra.mxu0 0.0
        %1376 = vmatprep.subr.mxu0 0.0
        %1377 = vmatpush1.msra.mxu0 0.0
        %1378 = vmatprep.subr.mxu0 0.0
        %1379 = vmatpush1.msra.mxu0 0.0
        %1380 = vmatprep.subr.mxu0 0.0
        %1381 = vmatpush1.msra.mxu0 0.0
        %1382 = vmatprep.subr.mxu0 0.0
        %1383 = vmatpush1.msra.mxu0 0.0
        %1384 = vmatprep.subr.mxu0 0.0
        %1385 = vmatpush1.msra.mxu0 0.0
        %1386 = vmatprep.subr.mxu0 0.0
        %1387 = vmatpush1.msra.mxu0 0.0
        %1388 = vmatprep.subr.mxu0 0.0
        %1389 = vmatpush1.msra.mxu0 0.0
        %1390 = vmatprep.subr.mxu0 0.0
        %1391 = vmatpush1.msra.mxu0 0.0
        %1392 = vmatprep.subr.mxu0 0.0
        %1393 = vmatpush1.msra.mxu0 0.0
        %1394 = vmatprep.subr.mxu0 0.0
        %1395 = vmatpush1.msra.mxu0 0.0
        %1396 = vmatprep.subr.mxu0 0.0
        %1397 = vmatpush1.msra.mxu0 0.0
        %1398 = vmatprep.subr.mxu0 0.0
        %1399 = vmatpush1.msra.mxu0 1.0
        %1400 = vmatprep.subr.mxu0 0.0
        %1401 = vmatpush1.msra.mxu0 1.0
        %1402 = vmatprep.subr.mxu0 0.0
        %1403 = vmatpush2.msra.mxu0 0.0
        %1404 = vmatprep.subr.mxu0 0.0
        %1405 = vmatpush2.msra.mxu0 0.0
        %1406 = vmatprep.subr.mxu0 0.0
        %1407 = vmatpush2.msra.mxu0 0.0
        %1408 = vmatprep.subr.mxu0 0.0
        %1409 = vmatpush2.msra.mxu0 0.0
        %1410 = vmatprep.subr.mxu0 0.0
        %1411 = vmatpush2.msra.mxu0 0.0
        %1412 = vmatprep.subr.mxu0 0.0
        %1413 = vmatpush2.msra.mxu0 0.0
        %1414 = vmatprep.subr.mxu0 0.0
        %1415 = vmatpush2.msra.mxu0 0.0
        %1416 = vmatprep.subr.mxu0 0.0
        %1417 = vmatpush2.msra.mxu0 0.0
        %1418 = vmatprep.subr.mxu0 0.0
        %1419 = vmatpush2.msra.mxu0 0.0
        %1420 = vmatprep.subr.mxu0 0.0
        %1421 = vmatpush2.msra.mxu0 0.0
        %1422 = vmatprep.subr.mxu0 0.0
        %1423 = vmatpush2.msra.mxu0 0.0
        %1424 = vmatprep.subr.mxu0 0.0
        %1425 = vmatpush2.msra.mxu0 0.0
        %1426 = vmatprep.subr.mxu0 0.0
        %1427 = vmatpush2.msra.mxu0 0.0
        %1428 = vmatprep.subr.mxu0 0.0
        %1429 = vmatpush2.msra.mxu0 0.0
        %1430 = vmatprep.subr.mxu0 0.0
        %1431 = vmatpush2.msra.mxu0 0.0
        %1432 = vmatprep.subr.mxu0 0.0
        %1433 = vmatpush2.msra.mxu0 0.0
        %1434 = vmatprep.mubr.f32.mxu0 0.0
        %1435 = vmatmul.mubr.f32.gmra.mxu0 %v1359
        %v1436 = vpop.f32.mrf.mxu0
        %v1437 = vadd.f32 0.0, %v1436
        %v1438 = vpop.f32.mrf.mxu0
        %1439 = vmatprep.mubr.f32.mxu0 0.0
        %1440 = vmatmul.mubr.f32.gmra.mxu0 %v1362
        %v1441 = vpop.f32.mrf.mxu0
        %v1442 = vadd.f32 0.0, %v1441
        %v1443 = vpop.f32.mrf.mxu0
        %1444 = vmatprep.mubr.f32.mxu0 0.0
        %1445 = vmatmul.mubr.f32.gmra.mxu0 %v1365
        %v1446 = vpop.f32.mrf.mxu0
        %v1447 = vadd.f32 0.0, %v1446
        %v1448 = vpop.f32.mrf.mxu0
        %1449 = vmatprep.mubr.f32.mxu0 0.0
        %1450 = vmatmul.mubr.f32.gmra.mxu0 %v1368
        %v1451 = vpop.f32.mrf.mxu0
        %v1452 = vadd.f32 0.0, %v1451
        %v1453 = vpop.f32.mrf.mxu0
        %1454 = vdwg.mxu0
        %v1455 = vmul.f32 %v235, %v241
        %v1456 = vmul.f32 %v236, %v242
        %v1458 = vsel %vm1159, %v1455, 0
        %v1461 = vsel %vm1159, %v1456, 0
        %1463 = vmatprep.subr.mxu0 0.0
        %1464 = vmatpush1.msra.mxu0 0.0
        %1465 = vmatprep.subr.mxu0 0.0
        %1466 = vmatpush1.msra.mxu0 0.0
        %1467 = vmatprep.subr.mxu0 0.0
        %1468 = vmatpush1.msra.mxu0 0.0
        %1469 = vmatprep.subr.mxu0 0.0
        %1470 = vmatpush1.msra.mxu0 0.0
        %1471 = vmatprep.subr.mxu0 0.0
        %1472 = vmatpush1.msra.mxu0 0.0
        %1473 = vmatprep.subr.mxu0 0.0
        %1474 = vmatpush1.msra.mxu0 0.0
        %1475 = vmatprep.subr.mxu0 0.0
        %1476 = vmatpush1.msra.mxu0 0.0
        %1477 = vmatprep.subr.mxu0 0.0
        %1478 = vmatpush1.msra.mxu0 0.0
        %1479 = vmatprep.subr.mxu0 0.0
        %1480 = vmatpush1.msra.mxu0 0.0
        %1481 = vmatprep.subr.mxu0 0.0
        %1482 = vmatpush1.msra.mxu0 0.0
        %1483 = vmatprep.subr.mxu0 0.0
        %1484 = vmatpush1.msra.mxu0 0.0
        %1485 = vmatprep.subr.mxu0 0.0
        %1486 = vmatpush1.msra.mxu0 0.0
        %1487 = vmatprep.subr.mxu0 0.0
        %1488 = vmatpush1.msra.mxu0 0.0
        %1489 = vmatprep.subr.mxu0 0.0
        %1490 = vmatpush1.msra.mxu0 0.0
        %1491 = vmatprep.subr.mxu0 0.0
        %1492 = vmatpush1.msra.mxu0 1.0
        %1493 = vmatprep.subr.mxu0 0.0
        %1494 = vmatpush1.msra.mxu0 1.0
        %1495 = vmatprep.subr.mxu0 0.0
        %1496 = vmatpush2.msra.mxu0 0.0
        %1497 = vmatprep.subr.mxu0 0.0
        %1498 = vmatpush2.msra.mxu0 0.0
        %1499 = vmatprep.subr.mxu0 0.0
        %1500 = vmatpush2.msra.mxu0 0.0
        %1501 = vmatprep.subr.mxu0 0.0
        %1502 = vmatpush2.msra.mxu0 0.0
        %1503 = vmatprep.subr.mxu0 0.0
        %1504 = vmatpush2.msra.mxu0 0.0
        %1505 = vmatprep.subr.mxu0 0.0
        %1506 = vmatpush2.msra.mxu0 0.0
        %1507 = vmatprep.subr.mxu0 0.0
        %1508 = vmatpush2.msra.mxu0 0.0
        %1509 = vmatprep.subr.mxu0 0.0
        %1510 = vmatpush2.msra.mxu0 0.0
        %1511 = vmatprep.subr.mxu0 0.0
        %1512 = vmatpush2.msra.mxu0 0.0
        %1513 = vmatprep.subr.mxu0 0.0
        %1514 = vmatpush2.msra.mxu0 0.0
        %1515 = vmatprep.subr.mxu0 0.0
        %1516 = vmatpush2.msra.mxu0 0.0
        %1517 = vmatprep.subr.mxu0 0.0
        %1518 = vmatpush2.msra.mxu0 0.0
        %1519 = vmatprep.subr.mxu0 0.0
        %1520 = vmatpush2.msra.mxu0 0.0
        %1521 = vmatprep.subr.mxu0 0.0
        %1522 = vmatpush2.msra.mxu0 0.0
        %1523 = vmatprep.subr.mxu0 0.0
        %1524 = vmatpush2.msra.mxu0 0.0
        %1525 = vmatprep.subr.mxu0 0.0
        %1526 = vmatpush2.msra.mxu0 0.0
        %1527 = vmatprep.mubr.f32.mxu0 0.0
        %1528 = vmatmul.mubr.f32.gmra.mxu0 %v1458
        %v1529 = vpop.f32.mrf.mxu0
        %v1530 = vadd.f32 0.0, %v1529
        %v1531 = vpop.f32.mrf.mxu0
        %1532 = vmatprep.mubr.f32.mxu0 0.0
        %1533 = vmatmul.mubr.f32.gmra.mxu0 %v1461
        %v1534 = vpop.f32.mrf.mxu0
        %v1535 = vadd.f32 0.0, %v1534
        %v1536 = vpop.f32.mrf.mxu0
        %1537 = vmatprep.mubr.f32.mxu0 0.0
        %1538 = vmatmul.mubr.f32.gmra.mxu0 %v1458
        %v1539 = vpop.f32.mrf.mxu0
        %v1540 = vadd.f32 0.0, %v1539
        %v1541 = vpop.f32.mrf.mxu0
        %1542 = vmatprep.mubr.f32.mxu0 0.0
        %1543 = vmatmul.mubr.f32.gmra.mxu0 %v1461
        %v1544 = vpop.f32.mrf.mxu0
        %v1545 = vadd.f32 0.0, %v1544
        %v1546 = vpop.f32.mrf.mxu0
        %1547 = vdwg.mxu0
        %1552 = vrot.lane.b32.xlu0 %v1336, 1
        %v1553 = vpop.permute.xlu0 %1552
        %1554 = vrot.lane.b32.xlu0 %v1341, 1
        %v1555 = vpop.permute.xlu0 %1554
        %1556 = vrot.lane.b32.xlu0 %v1346, 1
        %v1557 = vpop.permute.xlu0 %1556
        %1558 = vrot.lane.b32.xlu0 %v1351, 1
        %v1559 = vpop.permute.xlu0 %1558
        %1568 = vrot.lane.b32.xlu0 %v1437, 2
        %v1569 = vpop.permute.xlu0 %1568
        %1570 = vrot.lane.b32.xlu0 %v1442, 2
        %v1571 = vpop.permute.xlu0 %1570
        %1572 = vrot.lane.b32.xlu0 %v1447, 2
        %v1573 = vpop.permute.xlu0 %1572
        %1574 = vrot.lane.b32.xlu0 %v1452, 2
        %v1575 = vpop.permute.xlu0 %1574
        %1584 = vrot.lane.b32.xlu0 %v1530, 3
        %v1585 = vpop.permute.xlu0 %1584
        %1586 = vrot.lane.b32.xlu0 %v1535, 3
        %v1587 = vpop.permute.xlu0 %1586
        %1588 = vrot.lane.b32.xlu0 %v1540, 3
        %v1589 = vpop.permute.xlu0 %1588
        %1590 = vrot.lane.b32.xlu0 %v1545, 3
        %v1591 = vpop.permute.xlu0 %1590
        %vm1596 = vcmask 7168
        %v1597 = vsel %vm1596, %v1239, %v1553
        %v1598 = vsel %vm1596, %v1244, %v1555
        %v1599 = vsel %vm1596, %v1249, %v1557
        %v1600 = vsel %vm1596, %v1254, %v1559
        %vm1601 = vcmask 15360
        %v1602 = vsel %vm1601, %v1597, %v1569
        %v1603 = vsel %vm1601, %v1598, %v1571
        %v1604 = vsel %vm1601, %v1599, %v1573
        %v1605 = vsel %vm1601, %v1600, %v1575
        %vm1606 = vcmask 23552
        %v1607 = vsel %vm1606, %v1602, %v1585
        %v1608 = vsel %vm1606, %v1603, %v1587
        %v1609 = vsel %vm1606, %v1604, %v1589
        %v1610 = vsel %vm1606, %v1605, %v1591
        %vm1611 = vcmask 31744
        %1612 = vst.msk [vmem:[%s203] sm:$0xff] %vm1611, %v1607
        %1613 = vst.msk [vmem:[%s203 + $0x8] sm:$0xff] %vm1611, %v1608
        %1614 = vst.msk [vmem:[%s203 + $0x10] sm:$0xff] %vm1611, %v1609
        %1615 = vst.msk [vmem:[%s203 + $0x18] sm:$0xff] %vm1611, %v1610
        %p1616 = scmp.lt.s32.totalorder %s19, 1
        %s1617 = scalar_select %p1616, %s19, 1
        %s1618 = smul.addr %s1617, 4
        %s1619 = smul.addr %s1618, 8
        %s1620 = scalar_lea.vmem %s2, %s1619
        // Predicated region
        $region37: #{tpu_custom_call.1} parent=27 // pred_check
          %p1621 = pneg %p89
        $region38: #{tpu_custom_call.1} parent=27 // pred_check_branch
          %1623 = sbr.rel (%p1621) target = $region40
        $region39: #{tpu_custom_call.1} parent=27 // pred_region
          _
        $region40: #{tpu_custom_call.1} parent=27 // pred_fallthru
          _
      $region28: #{tpu_custom_call.1} parent=5 // pred_fallthru
        _
      %p1624 = scmp.le.s32.totalorder 2, %s14
      // Predicated region
      $region41: #{tpu_custom_call.1} parent=5 // pred_check
        %p1625 = pneg %p1624
      $region42: #{tpu_custom_call.1} parent=5 // pred_check_branch
        %1627 = sbr.rel (%p1625) target = $region44
      $region43: #{tpu_custom_call.1} parent=5 // pred_region
        %s1628 = ssub.s32 %s14, 2
        // Predicated region
        $region45: #{tpu_custom_call.1} parent=43 // pred_check
          %p1629 = pneg %p95
        $region46: #{tpu_custom_call.1} parent=43 // pred_check_branch
          %1631 = sbr.rel (%p1629) target = $region48
        $region47: #{tpu_custom_call.1} parent=43 // pred_region
          %p1632 = scmp.lt.s32.totalorder %s20, 1
          %s1633 = scalar_select %p1632, %s20, 1
          %s1634 = smul.addr %s1633, 4
          %s1635 = smul.addr %s1634, 8
          %s1636 = scalar_lea.vmem %s2, %s1635
        $region48: #{tpu_custom_call.1} parent=43 // pred_fallthru
          _
      $region44: #{tpu_custom_call.1} parent=5 // pred_fallthru
        _
    $region6: #{tpu_custom_call.1} parent=1 // loop_footer
      %s18 = sadd.s32 1, %s14
    $region7: #{tpu_custom_call.1} parent=1 // loop_footer_branch
      %13 = sbr.rel target = $region3
    $region8: #{tpu_custom_call.1} parent=1 // loop_exit
      _
    %1637 = vsyncpa [#allocation3], 1
    %s1638 = scalar_lea.sflag [#allocation3], 1
    %1639 = vsyncpa %s1638, 1
    %1640 = vsyncpa [#allocation5], 1
    %s1641 = scalar_lea.sflag [#allocation5], 1
    %1642 = vsyncpa %s1641, 1

</llo_original>
